<compile_context>
chip_gen: v7x
topology: tpu7x:2x2x1
jax: 0.10.0
libtpu: 0.0.40
codegen_flags: <defaults>
</compile_context>

<pallas_src>
import functools
from math import sqrt

import jax
import jax.numpy as jnp
from jax.experimental import pallas as pl
from jax.experimental.pallas import tpu as pltpu


def _round_up(x, m):
    return (x + m - 1) // m * m


# -----------------------------------------------------------------------------
# Fused RDB kernel factory
# -----------------------------------------------------------------------------
def _make_rdb_kernel(G0, C, G, H, W, compute_dtype):
    Hp, Wp = H + 2, W + 2
    Lpad = _round_up(Hp * Wp, 128)

    def kernel(*refs):
        x_ref = refs[0]                                   # (1, G0, Lpad) padded+flat input
        mask_ref = refs[1]                                # (1, Lpad)  1.0 on interior pixels
        conv_w = [refs[2 + 2 * i] for i in range(C)]      # (9*G, cin_i)
        conv_b = [refs[3 + 2 * i] for i in range(C)]      # (G, 1)
        wlff_ref = refs[2 + 2 * C]                        # (G0, G0 + C*G)
        blff_ref = refs[3 + 2 * C]                        # (G0, 1)
        o_ref = refs[4 + 2 * C]                           # (1, G0, Lpad)
        feat = refs[5 + 2 * C]                            # VMEM scratch (G0+C*G, Lpad) f32

        # Block input -> first G0 channels of the VMEM-resident feature map.
        feat[0:G0, :] = x_ref[0].astype(jnp.float32)
        mask = mask_ref[...]                              # broadcasts over channels

        for i in range(C):
            cin = G0 + i * G
            f_in = feat[0:cin, :]
            if compute_dtype != jnp.float32:
                f_in = f_in.astype(compute_dtype)
            # One MXU matmul for all 9 taps: (9G, cin) @ (cin, Lpad), f32 accumulate.
            t_all = jnp.dot(conv_w[i][...], f_in,
                            preferred_element_type=jnp.float32)
            # Accumulator starts from the broadcast bias (no separate bias add).
            acc = jnp.broadcast_to(conv_b[i][...], (G, Lpad))
            for k in range(9):
                dy, dx = k // 3, k % 3
                off = (dy - 1) * Wp + (dx - 1)
                t_k = t_all[k * G:(k + 1) * G, :]
                if off == 0:
                    acc = acc + t_k
                else:
                    # Static lane rotation on the XLU.  Wrapped lanes never land on
                    # interior pixels, and non-interior pixels are masked below.
                    acc = acc + pltpu.roll(t_k, shift=(-off) % Lpad, axis=1)
            y = jnp.maximum(acc, 0.1 * acc)               # LeakyReLU(0.1)
            # Keep the halo / padding exactly zero for the next stage's conv, then
            # "concatenate" by writing into this stage's channel slice of feat.
            feat[cin:cin + G, :] = y * mask

        # LFF 1x1 conv over the full concatenated features + residual (= feat[:G0]).
        f_all = feat[...]
        if compute_dtype != jnp.float32:
            f_all = f_all.astype(compute_dtype)
        y = jnp.dot(wlff_ref[...], f_all, preferred_element_type=jnp.float32)
        y = y + blff_ref[...] + feat[0:G0, :]
        o_ref[0] = y.astype(o_ref.dtype)

    return kernel


# -----------------------------------------------------------------------------
# Wrapper: NCHW in, NCHW out (matches the torch module)
# -----------------------------------------------------------------------------
def rdb_forward(params, x_nchw, *, compute_dtype=jnp.float32):
    N, G0, H, W = x_nchw.shape
    C = len(params["convs"])
    G = params["convs"][0][0].shape[-1]
    Hp, Wp = H + 2, W + 2
    L = Hp * Wp
    Lpad = _round_up(L, 128)
    Ctot = G0 + C * G

    # Pad the 1-pixel halo once (input channels only) and flatten spatial onto lanes.
    xp = jnp.pad(x_nchw, ((0, 0), (0, 0), (1, 1), (1, 1))).reshape(N, G0, L)
    xp = jnp.pad(xp, ((0, 0), (0, 0), (0, Lpad - L)))

    # Interior-pixel mask in the flattened padded layout (stage outputs * mask keeps
    # the conv halo at exactly zero).
    mask = jnp.zeros((Hp, Wp), jnp.float32).at[1:H + 1, 1:W + 1].set(1.0)
    mask = jnp.pad(mask.reshape(1, L), ((0, 0), (0, Lpad - L)))

    inputs = [xp, mask]
    in_specs = [
        pl.BlockSpec((1, G0, Lpad), lambda n: (n, 0, 0)),
        pl.BlockSpec((1, Lpad), lambda n: (0, 0)),
    ]
    for i, (w, b) in enumerate(params["convs"]):
        cin = G0 + i * G
        # HWIO (3,3,cin,G) -> (9*G, cin) with row index (dy*3+dx)*G + g.
        wk = jnp.transpose(w, (0, 1, 3, 2)).reshape(9 * G, cin).astype(compute_dtype)
        bk = b.reshape(G, 1).astype(jnp.float32)
        inputs += [wk, bk]
        in_specs += [pl.BlockSpec((9 * G, cin), lambda n: (0, 0)),
                     pl.BlockSpec((G, 1), lambda n: (0, 0))]
    w_lff, b_lff = params["lff"]
    inputs += [w_lff.T.astype(compute_dtype), b_lff.reshape(G0, 1).astype(jnp.float32)]
    in_specs += [pl.BlockSpec((G0, Ctot), lambda n: (0, 0)),
                 pl.BlockSpec((G0, 1), lambda n: (0, 0))]

    out_flat = pl.pallas_call(
        _make_rdb_kernel(G0, C, G, H, W, compute_dtype),
        out_shape=jax.ShapeDtypeStruct((N, G0, Lpad), x_nchw.dtype),
        grid_spec=pltpu.PrefetchScalarGridSpec(
            num_scalar_prefetch=0,
            grid=(N,),
            in_specs=in_specs,
            out_specs=pl.BlockSpec((1, G0, Lpad), lambda n: (n, 0, 0)),
            scratch_shapes=[pltpu.VMEM((Ctot, Lpad), jnp.float32)],
        ),
        compiler_params=pltpu.CompilerParams(
            dimension_semantics=("parallel",),   # batch across TCs on v7x
            vmem_limit_bytes=32 * 1024 * 1024,
        ),
    )(*inputs)

    # Crop halo / lane padding (cheap wrapper-side slice of the final output only).
    out = out_flat[:, :, :L].reshape(N, G0, Hp, Wp)[:, :, 1:H + 1, 1:W + 1]
    return out


# -----------------------------------------------------------------------------
# Parameters (HWIO conv weights, like the previous version)
# -----------------------------------------------------------------------------
def init_rdb_params(key, G0, C, G, dtype=jnp.float32):
    params = {"convs": [], "lff": None}
    for i in range(C):
        cin = G0 + i * G
        key, kw, kb = jax.random.split(key, 3)
        scale = 1.0 / sqrt(cin * 9)
        w = jax.random.normal(kw, (3, 3, cin, G), dtype) * scale     # HWIO
        b = jax.random.normal(kb, (G,), dtype) * scale
        params["convs"].append((w, b))
    cin = G0 + C * G
    key, kw, kb = jax.random.split(key, 3)
    scale = 1.0 / sqrt(cin)
    w = jax.random.normal(kw, (cin, G0), dtype) * scale              # 1x1 conv (Cin, Cout)
    b = jax.random.normal(kb, (G0,), dtype) * scale
    params["lff"] = (w, b)
    return params


# -----------------------------------------------------------------------------
# Pure-JAX reference (NCHW, mirrors the torch module)
# -----------------------------------------------------------------------------
def rdb_reference(params, x):
    feat = x
    dn = ("NCHW", "HWIO", "NCHW")
    for (w, b) in params["convs"]:
        out = jax.lax.conv_general_dilated(feat, w, (1, 1), ((1, 1), (1, 1)),
                                           dimension_numbers=dn)
        out = out + b[None, :, None, None]
        out = jnp.where(out > 0, out, 0.1 * out)
        feat = jnp.concatenate([feat, out], axis=1)
    w_lff, b_lff = params["lff"]
    y = jnp.einsum("nchw,cg->nghw", feat, w_lff) + b_lff[None, :, None, None] + x
    return y


if __name__ == "__main__":
    # Small deterministic example: N=2, G0=8, C=3, G=8, H=W=16 (NCHW, like torch).
    N, G0, C, G, H, W = 2, 8, 3, 8, 16, 16
    key = jax.random.PRNGKey(0)
    kx, kp = jax.random.split(key)
    x = jax.random.normal(kx, (N, G0, H, W), jnp.float32)
    params = init_rdb_params(kp, G0, C, G)

    ref = jax.block_until_ready(rdb_reference(params, x))

    # f32 MXU-operand path (tight tolerance).
    fwd_f32 = jax.jit(functools.partial(rdb_forward, compute_dtype=jnp.float32))
    out = jax.block_until_ready(fwd_f32(params, x))
    assert out.shape == (N, G0, H, W), out.shape
    assert jnp.allclose(out, ref, atol=1e-4, rtol=1e-4), (
        "f32 mismatch, max abs err = %g" % float(jnp.max(jnp.abs(out - ref))))

    # bf16 MXU-operand path (f32 accumulation / elementwise), looser tolerance.
    fwd_bf16 = jax.jit(functools.partial(rdb_forward, compute_dtype=jnp.bfloat16))
    out_bf16 = jax.block_until_ready(fwd_bf16(params, x))
    assert jnp.allclose(out_bf16, ref, atol=1e-1, rtol=1e-1), (
        "bf16 mismatch, max abs err = %g" % float(jnp.max(jnp.abs(out_bf16 - ref))))

    print("KERNEL_OK")
</pallas_src>

<mosaic_0001>
module attributes {stable_mosaic.version = 11 : i64} {
  func.func @kernel(%arg0: i32, %arg1: memref<1x8x384xf32, #tpu.memory_space<vmem>>, %arg2: memref<1x384xf32, #tpu.memory_space<vmem>>, %arg3: memref<72x8xf32, #tpu.memory_space<vmem>>, %arg4: memref<8x1xf32, #tpu.memory_space<vmem>>, %arg5: memref<72x16xf32, #tpu.memory_space<vmem>>, %arg6: memref<8x1xf32, #tpu.memory_space<vmem>>, %arg7: memref<72x24xf32, #tpu.memory_space<vmem>>, %arg8: memref<8x1xf32, #tpu.memory_space<vmem>>, %arg9: memref<8x32xf32, #tpu.memory_space<vmem>>, %arg10: memref<8x1xf32, #tpu.memory_space<vmem>>, %arg11: memref<1x8x384xf32, #tpu.memory_space<vmem>>, %arg12: memref<32x384xf32, #tpu.memory_space<vmem>>) attributes {dimension_semantics = [#tpu.dimension_semantics<parallel>], iteration_bounds = array<i64: 2>, scalar_prefetch = 0 : i64, scratch_operands = 1 : i64, tpu.core_type = #tpu.core_type<tc>, window_params = [{transform_indices = @transform_0, window_bounds = array<i64: 1, 8, 384>}, {pipeline_mode = #tpu.pipeline_mode<synchronous>, transform_indices = @transform_1, window_bounds = array<i64: 1, 384>}, {pipeline_mode = #tpu.pipeline_mode<synchronous>, transform_indices = @transform_2, window_bounds = array<i64: 72, 8>}, {pipeline_mode = #tpu.pipeline_mode<synchronous>, transform_indices = @transform_3, window_bounds = array<i64: 8, 1>}, {pipeline_mode = #tpu.pipeline_mode<synchronous>, transform_indices = @transform_4, window_bounds = array<i64: 72, 16>}, {pipeline_mode = #tpu.pipeline_mode<synchronous>, transform_indices = @transform_5, window_bounds = array<i64: 8, 1>}, {pipeline_mode = #tpu.pipeline_mode<synchronous>, transform_indices = @transform_6, window_bounds = array<i64: 72, 24>}, {pipeline_mode = #tpu.pipeline_mode<synchronous>, transform_indices = @transform_7, window_bounds = array<i64: 8, 1>}, {pipeline_mode = #tpu.pipeline_mode<synchronous>, transform_indices = @transform_8, window_bounds = array<i64: 8, 32>}, {pipeline_mode = #tpu.pipeline_mode<synchronous>, transform_indices = @transform_9, window_bounds = array<i64: 8, 1>}, {transform_indices = @transform_10, window_bounds = array<i64: 1, 8, 384>}]} {
    %c0 = arith.constant 0 : index
    %c0_0 = arith.constant 0 : index
    %c0_1 = arith.constant 0 : index
    %0 = vector.load %arg1[%c0, %c0_0, %c0_1] : memref<1x8x384xf32, #tpu.memory_space<vmem>>, vector<1x8x384xf32>
    %1 = vector.shape_cast %0 : vector<1x8x384xf32> to vector<8x384xf32>
    %c0_2 = arith.constant 0 : index
    %c0_3 = arith.constant 0 : index
    %2 = vector.load %arg12[%c0_2, %c0_3] : memref<32x384xf32, #tpu.memory_space<vmem>>, vector<8x384xf32>
    tpu.vector_store %arg12[%c0_2, %c0_3], %1 {strides = array<i32>} : memref<32x384xf32, #tpu.memory_space<vmem>>, vector<8x384xf32>,
    %c0_4 = arith.constant 0 : index
    %c0_5 = arith.constant 0 : index
    %3 = vector.load %arg2[%c0_4, %c0_5] : memref<1x384xf32, #tpu.memory_space<vmem>>, vector<1x384xf32>
    %c0_6 = arith.constant 0 : index
    %c0_7 = arith.constant 0 : index
    %4 = vector.load %arg12[%c0_6, %c0_7] : memref<32x384xf32, #tpu.memory_space<vmem>>, vector<8x384xf32>
    %c0_8 = arith.constant 0 : index
    %c0_9 = arith.constant 0 : index
    %5 = vector.load %arg3[%c0_8, %c0_9] : memref<72x8xf32, #tpu.memory_space<vmem>>, vector<72x8xf32>
    %cst = arith.constant dense<0.000000e+00> : vector<72x384xf32>
    %6 = tpu.matmul %5, %4, %cst {dimension_numbers = #tpu.dot_dimension_numbers<[1], [0], [0], [1], [0, 0, 1, 1], [], []>} : vector<72x8xf32>, vector<8x384xf32>, vector<72x384xf32> -> vector<72x384xf32>
    %c0_10 = arith.constant 0 : index
    %c0_11 = arith.constant 0 : index
    %7 = vector.load %arg4[%c0_10, %c0_11] : memref<8x1xf32, #tpu.memory_space<vmem>>, vector<8x1xf32>
    %8 = vector.shape_cast %7 : vector<8x1xf32> to vector<8x1xf32>
    %9 = vector.broadcast %8 : vector<8x1xf32> to vector<8x384xf32>
    %10 = vector.extract_strided_slice %6 {offsets = [0, 0], sizes = [8, 384], strides = [1, 1]} : vector<72x384xf32> to vector<8x384xf32>
    %c19_i32 = arith.constant 19 : i32
    %11 = tpu.dynamic_rotate %10 by %c19_i32 dim 1 : vector<8x384xf32>, i32 -> vector<8x384xf32>
    %12 = arith.addf %9, %11 : vector<8x384xf32>
    %13 = vector.extract_strided_slice %6 {offsets = [8, 0], sizes = [8, 384], strides = [1, 1]} : vector<72x384xf32> to vector<8x384xf32>
    %c18_i32 = arith.constant 18 : i32
    %14 = tpu.dynamic_rotate %13 by %c18_i32 dim 1 : vector<8x384xf32>, i32 -> vector<8x384xf32>
    %15 = arith.addf %12, %14 : vector<8x384xf32>
    %16 = vector.extract_strided_slice %6 {offsets = [16, 0], sizes = [8, 384], strides = [1, 1]} : vector<72x384xf32> to vector<8x384xf32>
    %c17_i32 = arith.constant 17 : i32
    %17 = tpu.dynamic_rotate %16 by %c17_i32 dim 1 : vector<8x384xf32>, i32 -> vector<8x384xf32>
    %18 = arith.addf %15, %17 : vector<8x384xf32>
    %19 = vector.extract_strided_slice %6 {offsets = [24, 0], sizes = [8, 384], strides = [1, 1]} : vector<72x384xf32> to vector<8x384xf32>
    %c1_i32 = arith.constant 1 : i32
    %20 = tpu.dynamic_rotate %19 by %c1_i32 dim 1 : vector<8x384xf32>, i32 -> vector<8x384xf32>
    %21 = arith.addf %18, %20 : vector<8x384xf32>
    %22 = vector.extract_strided_slice %6 {offsets = [32, 0], sizes = [8, 384], strides = [1, 1]} : vector<72x384xf32> to vector<8x384xf32>
    %23 = arith.addf %21, %22 : vector<8x384xf32>
    %24 = vector.extract_strided_slice %6 {offsets = [40, 0], sizes = [8, 384], strides = [1, 1]} : vector<72x384xf32> to vector<8x384xf32>
    %c383_i32 = arith.constant 383 : i32
    %25 = tpu.dynamic_rotate %24 by %c383_i32 dim 1 : vector<8x384xf32>, i32 -> vector<8x384xf32>
    %26 = arith.addf %23, %25 : vector<8x384xf32>
    %27 = vector.extract_strided_slice %6 {offsets = [48, 0], sizes = [8, 384], strides = [1, 1]} : vector<72x384xf32> to vector<8x384xf32>
    %c367_i32 = arith.constant 367 : i32
    %28 = tpu.dynamic_rotate %27 by %c367_i32 dim 1 : vector<8x384xf32>, i32 -> vector<8x384xf32>
    %29 = arith.addf %26, %28 : vector<8x384xf32>
    %30 = vector.extract_strided_slice %6 {offsets = [56, 0], sizes = [8, 384], strides = [1, 1]} : vector<72x384xf32> to vector<8x384xf32>
    %c366_i32 = arith.constant 366 : i32
    %31 = tpu.dynamic_rotate %30 by %c366_i32 dim 1 : vector<8x384xf32>, i32 -> vector<8x384xf32>
    %32 = arith.addf %29, %31 : vector<8x384xf32>
    %33 = vector.extract_strided_slice %6 {offsets = [64, 0], sizes = [8, 384], strides = [1, 1]} : vector<72x384xf32> to vector<8x384xf32>
    %c365_i32 = arith.constant 365 : i32
    %34 = tpu.dynamic_rotate %33 by %c365_i32 dim 1 : vector<8x384xf32>, i32 -> vector<8x384xf32>
    %35 = arith.addf %32, %34 : vector<8x384xf32>
    %cst_12 = arith.constant 1.000000e-01 : f32
    %36 = vector.broadcast %cst_12 : f32 to vector<8x384xf32>
    %37 = arith.mulf %36, %35 : vector<8x384xf32>
    %38 = arith.maximumf %35, %37 : vector<8x384xf32>
    %39 = vector.broadcast %3 : vector<1x384xf32> to vector<8x384xf32>
    %40 = arith.mulf %38, %39 : vector<8x384xf32>
    %c8 = arith.constant 8 : index
    %c0_13 = arith.constant 0 : index
    %41 = vector.load %arg12[%c8, %c0_13] : memref<32x384xf32, #tpu.memory_space<vmem>>, vector<8x384xf32>
    tpu.vector_store %arg12[%c8, %c0_13], %40 {strides = array<i32>} : memref<32x384xf32, #tpu.memory_space<vmem>>, vector<8x384xf32>,
    %c0_14 = arith.constant 0 : index
    %c0_15 = arith.constant 0 : index
    %42 = vector.load %arg12[%c0_14, %c0_15] : memref<32x384xf32, #tpu.memory_space<vmem>>, vector<16x384xf32>
    %c0_16 = arith.constant 0 : index
    %c0_17 = arith.constant 0 : index
    %43 = vector.load %arg5[%c0_16, %c0_17] : memref<72x16xf32, #tpu.memory_space<vmem>>, vector<72x16xf32>
    %cst_18 = arith.constant dense<0.000000e+00> : vector<72x384xf32>
    %44 = tpu.matmul %43, %42, %cst_18 {dimension_numbers = #tpu.dot_dimension_numbers<[1], [0], [0], [1], [0, 0, 1, 1], [], []>} : vector<72x16xf32>, vector<16x384xf32>, vector<72x384xf32> -> vector<72x384xf32>
    %c0_19 = arith.constant 0 : index
    %c0_20 = arith.constant 0 : index
    %45 = vector.load %arg6[%c0_19, %c0_20] : memref<8x1xf32, #tpu.memory_space<vmem>>, vector<8x1xf32>
    %46 = vector.shape_cast %45 : vector<8x1xf32> to vector<8x1xf32>
    %47 = vector.broadcast %46 : vector<8x1xf32> to vector<8x384xf32>
    %48 = vector.extract_strided_slice %44 {offsets = [0, 0], sizes = [8, 384], strides = [1, 1]} : vector<72x384xf32> to vector<8x384xf32>
    %c19_i32_21 = arith.constant 19 : i32
    %49 = tpu.dynamic_rotate %48 by %c19_i32_21 dim 1 : vector<8x384xf32>, i32 -> vector<8x384xf32>
    %50 = arith.addf %47, %49 : vector<8x384xf32>
    %51 = vector.extract_strided_slice %44 {offsets = [8, 0], sizes = [8, 384], strides = [1, 1]} : vector<72x384xf32> to vector<8x384xf32>
    %c18_i32_22 = arith.constant 18 : i32
    %52 = tpu.dynamic_rotate %51 by %c18_i32_22 dim 1 : vector<8x384xf32>, i32 -> vector<8x384xf32>
    %53 = arith.addf %50, %52 : vector<8x384xf32>
    %54 = vector.extract_strided_slice %44 {offsets = [16, 0], sizes = [8, 384], strides = [1, 1]} : vector<72x384xf32> to vector<8x384xf32>
    %c17_i32_23 = arith.constant 17 : i32
    %55 = tpu.dynamic_rotate %54 by %c17_i32_23 dim 1 : vector<8x384xf32>, i32 -> vector<8x384xf32>
    %56 = arith.addf %53, %55 : vector<8x384xf32>
    %57 = vector.extract_strided_slice %44 {offsets = [24, 0], sizes = [8, 384], strides = [1, 1]} : vector<72x384xf32> to vector<8x384xf32>
    %c1_i32_24 = arith.constant 1 : i32
    %58 = tpu.dynamic_rotate %57 by %c1_i32_24 dim 1 : vector<8x384xf32>, i32 -> vector<8x384xf32>
    %59 = arith.addf %56, %58 : vector<8x384xf32>
    %60 = vector.extract_strided_slice %44 {offsets = [32, 0], sizes = [8, 384], strides = [1, 1]} : vector<72x384xf32> to vector<8x384xf32>
    %61 = arith.addf %59, %60 : vector<8x384xf32>
    %62 = vector.extract_strided_slice %44 {offsets = [40, 0], sizes = [8, 384], strides = [1, 1]} : vector<72x384xf32> to vector<8x384xf32>
    %c383_i32_25 = arith.constant 383 : i32
    %63 = tpu.dynamic_rotate %62 by %c383_i32_25 dim 1 : vector<8x384xf32>, i32 -> vector<8x384xf32>
    %64 = arith.addf %61, %63 : vector<8x384xf32>
    %65 = vector.extract_strided_slice %44 {offsets = [48, 0], sizes = [8, 384], strides = [1, 1]} : vector<72x384xf32> to vector<8x384xf32>
    %c367_i32_26 = arith.constant 367 : i32
    %66 = tpu.dynamic_rotate %65 by %c367_i32_26 dim 1 : vector<8x384xf32>, i32 -> vector<8x384xf32>
    %67 = arith.addf %64, %66 : vector<8x384xf32>
    %68 = vector.extract_strided_slice %44 {offsets = [56, 0], sizes = [8, 384], strides = [1, 1]} : vector<72x384xf32> to vector<8x384xf32>
    %c366_i32_27 = arith.constant 366 : i32
    %69 = tpu.dynamic_rotate %68 by %c366_i32_27 dim 1 : vector<8x384xf32>, i32 -> vector<8x384xf32>
    %70 = arith.addf %67, %69 : vector<8x384xf32>
    %71 = vector.extract_strided_slice %44 {offsets = [64, 0], sizes = [8, 384], strides = [1, 1]} : vector<72x384xf32> to vector<8x384xf32>
    %c365_i32_28 = arith.constant 365 : i32
    %72 = tpu.dynamic_rotate %71 by %c365_i32_28 dim 1 : vector<8x384xf32>, i32 -> vector<8x384xf32>
    %73 = arith.addf %70, %72 : vector<8x384xf32>
    %cst_29 = arith.constant 1.000000e-01 : f32
    %74 = vector.broadcast %cst_29 : f32 to vector<8x384xf32>
    %75 = arith.mulf %74, %73 : vector<8x384xf32>
    %76 = arith.maximumf %73, %75 : vector<8x384xf32>
    %77 = vector.broadcast %3 : vector<1x384xf32> to vector<8x384xf32>
    %78 = arith.mulf %76, %77 : vector<8x384xf32>
    %c16 = arith.constant 16 : index
    %c0_30 = arith.constant 0 : index
    %79 = vector.load %arg12[%c16, %c0_30] : memref<32x384xf32, #tpu.memory_space<vmem>>, vector<8x384xf32>
    tpu.vector_store %arg12[%c16, %c0_30], %78 {strides = array<i32>} : memref<32x384xf32, #tpu.memory_space<vmem>>, vector<8x384xf32>,
    %c0_31 = arith.constant 0 : index
    %c0_32 = arith.constant 0 : index
    %80 = vector.load %arg12[%c0_31, %c0_32] : memref<32x384xf32, #tpu.memory_space<vmem>>, vector<24x384xf32>
    %c0_33 = arith.constant 0 : index
    %c0_34 = arith.constant 0 : index
    %81 = vector.load %arg7[%c0_33, %c0_34] : memref<72x24xf32, #tpu.memory_space<vmem>>, vector<72x24xf32>
    %cst_35 = arith.constant dense<0.000000e+00> : vector<72x384xf32>
    %82 = tpu.matmul %81, %80, %cst_35 {dimension_numbers = #tpu.dot_dimension_numbers<[1], [0], [0], [1], [0, 0, 1, 1], [], []>} : vector<72x24xf32>, vector<24x384xf32>, vector<72x384xf32> -> vector<72x384xf32>
    %c0_36 = arith.constant 0 : index
    %c0_37 = arith.constant 0 : index
    %83 = vector.load %arg8[%c0_36, %c0_37] : memref<8x1xf32, #tpu.memory_space<vmem>>, vector<8x1xf32>
    %84 = vector.shape_cast %83 : vector<8x1xf32> to vector<8x1xf32>
    %85 = vector.broadcast %84 : vector<8x1xf32> to vector<8x384xf32>
    %86 = vector.extract_strided_slice %82 {offsets = [0, 0], sizes = [8, 384], strides = [1, 1]} : vector<72x384xf32> to vector<8x384xf32>
    %c19_i32_38 = arith.constant 19 : i32
    %87 = tpu.dynamic_rotate %86 by %c19_i32_38 dim 1 : vector<8x384xf32>, i32 -> vector<8x384xf32>
    %88 = arith.addf %85, %87 : vector<8x384xf32>
    %89 = vector.extract_strided_slice %82 {offsets = [8, 0], sizes = [8, 384], strides = [1, 1]} : vector<72x384xf32> to vector<8x384xf32>
    %c18_i32_39 = arith.constant 18 : i32
    %90 = tpu.dynamic_rotate %89 by %c18_i32_39 dim 1 : vector<8x384xf32>, i32 -> vector<8x384xf32>
    %91 = arith.addf %88, %90 : vector<8x384xf32>
    %92 = vector.extract_strided_slice %82 {offsets = [16, 0], sizes = [8, 384], strides = [1, 1]} : vector<72x384xf32> to vector<8x384xf32>
    %c17_i32_40 = arith.constant 17 : i32
    %93 = tpu.dynamic_rotate %92 by %c17_i32_40 dim 1 : vector<8x384xf32>, i32 -> vector<8x384xf32>
    %94 = arith.addf %91, %93 : vector<8x384xf32>
    %95 = vector.extract_strided_slice %82 {offsets = [24, 0], sizes = [8, 384], strides = [1, 1]} : vector<72x384xf32> to vector<8x384xf32>
    %c1_i32_41 = arith.constant 1 : i32
    %96 = tpu.dynamic_rotate %95 by %c1_i32_41 dim 1 : vector<8x384xf32>, i32 -> vector<8x384xf32>
    %97 = arith.addf %94, %96 : vector<8x384xf32>
    %98 = vector.extract_strided_slice %82 {offsets = [32, 0], sizes = [8, 384], strides = [1, 1]} : vector<72x384xf32> to vector<8x384xf32>
    %99 = arith.addf %97, %98 : vector<8x384xf32>
    %100 = vector.extract_strided_slice %82 {offsets = [40, 0], sizes = [8, 384], strides = [1, 1]} : vector<72x384xf32> to vector<8x384xf32>
    %c383_i32_42 = arith.constant 383 : i32
    %101 = tpu.dynamic_rotate %100 by %c383_i32_42 dim 1 : vector<8x384xf32>, i32 -> vector<8x384xf32>
    %102 = arith.addf %99, %101 : vector<8x384xf32>
    %103 = vector.extract_strided_slice %82 {offsets = [48, 0], sizes = [8, 384], strides = [1, 1]} : vector<72x384xf32> to vector<8x384xf32>
    %c367_i32_43 = arith.constant 367 : i32
    %104 = tpu.dynamic_rotate %103 by %c367_i32_43 dim 1 : vector<8x384xf32>, i32 -> vector<8x384xf32>
    %105 = arith.addf %102, %104 : vector<8x384xf32>
    %106 = vector.extract_strided_slice %82 {offsets = [56, 0], sizes = [8, 384], strides = [1, 1]} : vector<72x384xf32> to vector<8x384xf32>
    %c366_i32_44 = arith.constant 366 : i32
    %107 = tpu.dynamic_rotate %106 by %c366_i32_44 dim 1 : vector<8x384xf32>, i32 -> vector<8x384xf32>
    %108 = arith.addf %105, %107 : vector<8x384xf32>
    %109 = vector.extract_strided_slice %82 {offsets = [64, 0], sizes = [8, 384], strides = [1, 1]} : vector<72x384xf32> to vector<8x384xf32>
    %c365_i32_45 = arith.constant 365 : i32
    %110 = tpu.dynamic_rotate %109 by %c365_i32_45 dim 1 : vector<8x384xf32>, i32 -> vector<8x384xf32>
    %111 = arith.addf %108, %110 : vector<8x384xf32>
    %cst_46 = arith.constant 1.000000e-01 : f32
    %112 = vector.broadcast %cst_46 : f32 to vector<8x384xf32>
    %113 = arith.mulf %112, %111 : vector<8x384xf32>
    %114 = arith.maximumf %111, %113 : vector<8x384xf32>
    %115 = vector.broadcast %3 : vector<1x384xf32> to vector<8x384xf32>
    %116 = arith.mulf %114, %115 : vector<8x384xf32>
    %c24 = arith.constant 24 : index
    %c0_47 = arith.constant 0 : index
    %117 = vector.load %arg12[%c24, %c0_47] : memref<32x384xf32, #tpu.memory_space<vmem>>, vector<8x384xf32>
    tpu.vector_store %arg12[%c24, %c0_47], %116 {strides = array<i32>} : memref<32x384xf32, #tpu.memory_space<vmem>>, vector<8x384xf32>,
    %c0_48 = arith.constant 0 : index
    %c0_49 = arith.constant 0 : index
    %118 = vector.load %arg12[%c0_48, %c0_49] : memref<32x384xf32, #tpu.memory_space<vmem>>, vector<32x384xf32>
    %c0_50 = arith.constant 0 : index
    %c0_51 = arith.constant 0 : index
    %119 = vector.load %arg9[%c0_50, %c0_51] : memref<8x32xf32, #tpu.memory_space<vmem>>, vector<8x32xf32>
    %cst_52 = arith.constant dense<0.000000e+00> : vector<8x384xf32>
    %120 = tpu.matmul %119, %118, %cst_52 {dimension_numbers = #tpu.dot_dimension_numbers<[1], [0], [0], [1], [0, 0, 1, 1], [], []>} : vector<8x32xf32>, vector<32x384xf32>, vector<8x384xf32> -> vector<8x384xf32>
    %c0_53 = arith.constant 0 : index
    %c0_54 = arith.constant 0 : index
    %121 = vector.load %arg10[%c0_53, %c0_54] : memref<8x1xf32, #tpu.memory_space<vmem>>, vector<8x1xf32>
    %122 = vector.broadcast %121 : vector<8x1xf32> to vector<8x384xf32>
    %123 = arith.addf %120, %122 : vector<8x384xf32>
    %c0_55 = arith.constant 0 : index
    %c0_56 = arith.constant 0 : index
    %124 = vector.load %arg12[%c0_55, %c0_56] : memref<32x384xf32, #tpu.memory_space<vmem>>, vector<8x384xf32>
    %125 = arith.addf %123, %124 : vector<8x384xf32>
    %c0_57 = arith.constant 0 : index
    %c0_58 = arith.constant 0 : index
    %c0_59 = arith.constant 0 : index
    %126 = vector.load %arg11[%c0_57, %c0_58, %c0_59] : memref<1x8x384xf32, #tpu.memory_space<vmem>>, vector<1x8x384xf32>
    %127 = vector.shape_cast %126 : vector<1x8x384xf32> to vector<8x384xf32>
    %128 = vector.shape_cast %125 : vector<8x384xf32> to vector<1x8x384xf32>
    tpu.vector_store %arg11[%c0_57, %c0_58, %c0_59], %128 {strides = array<i32>} : memref<1x8x384xf32, #tpu.memory_space<vmem>>, vector<1x8x384xf32>,
    return
  }
  func.func @transform_0(%arg0: i32) -> (i32, i32, i32) {
    %c0_i32 = arith.constant 0 : i32
    %c0_i32_0 = arith.constant 0 : i32
    %c0_i32_1 = arith.constant 0 : i32
    return %arg0, %c0_i32, %c0_i32_0 : i32, i32, i32
  }
  func.func @transform_1(%arg0: i32) -> (i32, i32) {
    %c0_i32 = arith.constant 0 : i32
    %c0_i32_0 = arith.constant 0 : i32
    %c0_i32_1 = arith.constant 0 : i32
    return %c0_i32, %c0_i32_0 : i32, i32
  }
  func.func @transform_2(%arg0: i32) -> (i32, i32) {
    %c0_i32 = arith.constant 0 : i32
    %c0_i32_0 = arith.constant 0 : i32
    %c0_i32_1 = arith.constant 0 : i32
    return %c0_i32, %c0_i32_0 : i32, i32
  }
  func.func @transform_3(%arg0: i32) -> (i32, i32) {
    %c0_i32 = arith.constant 0 : i32
    %c0_i32_0 = arith.constant 0 : i32
    %c0_i32_1 = arith.constant 0 : i32
    return %c0_i32, %c0_i32_0 : i32, i32
  }
  func.func @transform_4(%arg0: i32) -> (i32, i32) {
    %c0_i32 = arith.constant 0 : i32
    %c0_i32_0 = arith.constant 0 : i32
    %c0_i32_1 = arith.constant 0 : i32
    return %c0_i32, %c0_i32_0 : i32, i32
  }
  func.func @transform_5(%arg0: i32) -> (i32, i32) {
    %c0_i32 = arith.constant 0 : i32
    %c0_i32_0 = arith.constant 0 : i32
    %c0_i32_1 = arith.constant 0 : i32
    return %c0_i32, %c0_i32_0 : i32, i32
  }
  func.func @transform_6(%arg0: i32) -> (i32, i32) {
    %c0_i32 = arith.constant 0 : i32
    %c0_i32_0 = arith.constant 0 : i32
    %c0_i32_1 = arith.constant 0 : i32
    return %c0_i32, %c0_i32_0 : i32, i32
  }
  func.func @transform_7(%arg0: i32) -> (i32, i32) {
    %c0_i32 = arith.constant 0 : i32
    %c0_i32_0 = arith.constant 0 : i32
    %c0_i32_1 = arith.constant 0 : i32
    return %c0_i32, %c0_i32_0 : i32, i32
  }
  func.func @transform_8(%arg0: i32) -> (i32, i32) {
    %c0_i32 = arith.constant 0 : i32
    %c0_i32_0 = arith.constant 0 : i32
    %c0_i32_1 = arith.constant 0 : i32
    return %c0_i32, %c0_i32_0 : i32, i32
  }
  func.func @transform_9(%arg0: i32) -> (i32, i32) {
    %c0_i32 = arith.constant 0 : i32
    %c0_i32_0 = arith.constant 0 : i32
    %c0_i32_1 = arith.constant 0 : i32
    return %c0_i32, %c0_i32_0 : i32, i32
  }
  func.func @transform_10(%arg0: i32) -> (i32, i32, i32) {
    %c0_i32 = arith.constant 0 : i32
    %c0_i32_0 = arith.constant 0 : i32
    %c0_i32_1 = arith.constant 0 : i32
    return %arg0, %c0_i32, %c0_i32_0 : i32, i32, i32
  }
}

</mosaic_0001>

<llo_original>
// kernel: rdb_forward.1
$region0: #{rdb_forward.1}
  #allocation0 [shape = 'u32[]', space=smem, size = 0x4, offset = 0x4, fixed_abs, tag = 'smem constant byte address 0x4 - core index']
  #allocation1 [shape = 'u32[144,128]{1,0:T(1,128)}', space=vmem, size = 0x12000, scoped, tag = 'internal scratch']
  #allocation2 [shape = 'f32[32,384]{1,0:T(8,128)}', space=vmem, size = 0xc000, scoped, tag = 'scratch operand']
  %s0 = inlined_call_operand.vmem [shape: f32[2,8,384], index: 0, kind: input, shape index: {}]
  %s1 = inlined_call_operand.vmem [shape: f32[1,384], index: 1, kind: input, shape index: {}]
  %s2 = inlined_call_operand.vmem [shape: f32[72,8], index: 2, kind: input, shape index: {}]
  %s3 = inlined_call_operand.vmem [shape: f32[8,1], index: 3, kind: input, shape index: {}]
  %s4 = inlined_call_operand.vmem [shape: f32[72,16], index: 4, kind: input, shape index: {}]
  %s5 = inlined_call_operand.vmem [shape: f32[8,1], index: 5, kind: input, shape index: {}]
  %s6 = inlined_call_operand.vmem [shape: f32[72,24], index: 6, kind: input, shape index: {}]
  %s7 = inlined_call_operand.vmem [shape: f32[8,1], index: 7, kind: input, shape index: {}]
  %s8 = inlined_call_operand.vmem [shape: f32[8,32], index: 8, kind: input, shape index: {}]
  %s9 = inlined_call_operand.vmem [shape: f32[8,1], index: 9, kind: input, shape index: {}]
  %s10 = inlined_call_operand.vmem [shape: f32[2,8,384], index: 10, kind: output, shape index: {}]
  %s11 = sld [smem:[#allocation0]]
  $region73: #{rdb_forward.1} parent=0
    _
  %s13 = ssub.s32 1, %s11
  %s14 = scalar_select 0, %s13, %s11
  loop: start=0, step=1, limit=4
  $region2: #{rdb_forward.1} parent=0 // loop_pre_header
    _
  $region3: #{rdb_forward.1} parent=0 // loop_header
    %s16 = sphi 0, %s20
    %p17 = scmp.ge.s32.totalorder %s16, 4
    %s26 = sphi 0, %s28
    %s29 = sphi 0, %s26
    %s30 = sphi 0, %s29
    %s46 = sphi 0, %s30
    %s50 = sphi 0, %s50
    %s52 = sphi 0, %s50
    %s53 = sphi 0, %s52
    %s67 = sphi 0, %s53
    %s71 = sphi 0, %s71
    %s73 = sphi 0, %s71
    %s74 = sphi 0, %s73
    %s88 = sphi 0, %s74
    %s92 = sphi 0, %s92
    %s94 = sphi 0, %s92
    %s95 = sphi 0, %s94
    %s109 = sphi 0, %s95
    %s113 = sphi 0, %s113
    %s115 = sphi 0, %s113
    %s116 = sphi 0, %s115
    %s130 = sphi 0, %s116
    %s134 = sphi 0, %s134
    %s136 = sphi 0, %s134
    %s137 = sphi 0, %s136
    %s151 = sphi 0, %s137
    %s155 = sphi 0, %s155
    %s157 = sphi 0, %s155
    %s158 = sphi 0, %s157
    %s172 = sphi 0, %s158
    %s176 = sphi 0, %s176
    %s178 = sphi 0, %s176
    %s179 = sphi 0, %s178
    %s193 = sphi 0, %s179
    %s197 = sphi 0, %s197
    %s199 = sphi 0, %s197
    %s200 = sphi 0, %s199
    %s214 = sphi 0, %s200
    %s218 = sphi 0, %s218
    %s220 = sphi 0, %s218
    %s221 = sphi 0, %s220
    %s235 = sphi 0, %s221
    %s241 = sphi 0, %s243
    %s244 = sphi 0, %s241
    %s245 = sphi 0, %s244
    %s261 = sphi 0, %s245
  $region4: #{rdb_forward.1} parent=0 // loop_header_branch
    %19 = sbr.rel (%p17) target = $region8
  $region5: #{rdb_forward.1} parent=0 // loop_body
    %s21 = ssub.s32 %s16, 1
    %s22 = ssub.s32 %s16, 2
    %s23 = sadd.s32 %s16, 1
    %s24 = ssub.s32 %s16, %s23
    %p25 = scmp.eq.s32.totalorder %s24, 0
    %s27 = sadd.s32 %s26, 1
    %s28 = scalar_select %p25, %s26, %s27
    %p31 = pneg %p25
    %p32 = scmp.eq.s32.totalorder %s16, 1
    %p33 = por %p31, %p32
    %p34 = scmp.ne.s32.totalorder %s26, %s29
    %p35 = scmp.eq.s32.totalorder %s16, 0
    %p36 = por %p34, %p35
    %p37 = scmp.ne.s32.totalorder %s26, %s29
    %p38 = scmp.eq.s32.totalorder %s21, 1
    %p39 = por %p37, %p38
    %p40 = scmp.ne.s32.totalorder %s29, %s30
    %p41 = scmp.eq.s32.totalorder %s21, 0
    %p42 = por %p40, %p41
    %p43 = scmp.ne.s32.totalorder %s29, %s30
    %p44 = scmp.eq.s32.totalorder %s22, 1
    %p45 = por %p43, %p44
    %p47 = scmp.ne.s32.totalorder %s30, %s46
    %p48 = scmp.eq.s32.totalorder %s22, 0
    %p49 = por %p47, %p48
    %s51 = sadd.s32 %s50, 1
    %p54 = scmp.eq.s32.totalorder %s16, 1
    %p55 = scmp.ne.s32.totalorder %s50, %s52
    %p56 = scmp.eq.s32.totalorder %s16, 0
    %p57 = por %p55, %p56
    %p58 = scmp.ne.s32.totalorder %s50, %s52
    %p59 = scmp.eq.s32.totalorder %s21, 1
    %p60 = por %p58, %p59
    %p61 = scmp.ne.s32.totalorder %s52, %s53
    %p62 = scmp.eq.s32.totalorder %s21, 0
    %p63 = por %p61, %p62
    %p64 = scmp.ne.s32.totalorder %s52, %s53
    %p65 = scmp.eq.s32.totalorder %s22, 1
    %p66 = por %p64, %p65
    %p68 = scmp.ne.s32.totalorder %s53, %s67
    %p69 = scmp.eq.s32.totalorder %s22, 0
    %p70 = por %p68, %p69
    %s72 = sadd.s32 %s71, 1
    %p75 = scmp.eq.s32.totalorder %s16, 1
    %p76 = scmp.ne.s32.totalorder %s71, %s73
    %p77 = scmp.eq.s32.totalorder %s16, 0
    %p78 = por %p76, %p77
    %p79 = scmp.ne.s32.totalorder %s71, %s73
    %p80 = scmp.eq.s32.totalorder %s21, 1
    %p81 = por %p79, %p80
    %p82 = scmp.ne.s32.totalorder %s73, %s74
    %p83 = scmp.eq.s32.totalorder %s21, 0
    %p84 = por %p82, %p83
    %p85 = scmp.ne.s32.totalorder %s73, %s74
    %p86 = scmp.eq.s32.totalorder %s22, 1
    %p87 = por %p85, %p86
    %p89 = scmp.ne.s32.totalorder %s74, %s88
    %p90 = scmp.eq.s32.totalorder %s22, 0
    %p91 = por %p89, %p90
    %s93 = sadd.s32 %s92, 1
    %p96 = scmp.eq.s32.totalorder %s16, 1
    %p97 = scmp.ne.s32.totalorder %s92, %s94
    %p98 = scmp.eq.s32.totalorder %s16, 0
    %p99 = por %p97, %p98
    %p100 = scmp.ne.s32.totalorder %s92, %s94
    %p101 = scmp.eq.s32.totalorder %s21, 1
    %p102 = por %p100, %p101
    %p103 = scmp.ne.s32.totalorder %s94, %s95
    %p104 = scmp.eq.s32.totalorder %s21, 0
    %p105 = por %p103, %p104
    %p106 = scmp.ne.s32.totalorder %s94, %s95
    %p107 = scmp.eq.s32.totalorder %s22, 1
    %p108 = por %p106, %p107
    %p110 = scmp.ne.s32.totalorder %s95, %s109
    %p111 = scmp.eq.s32.totalorder %s22, 0
    %p112 = por %p110, %p111
    %s114 = sadd.s32 %s113, 1
    %p117 = scmp.eq.s32.totalorder %s16, 1
    %p118 = scmp.ne.s32.totalorder %s113, %s115
    %p119 = scmp.eq.s32.totalorder %s16, 0
    %p120 = por %p118, %p119
    %p121 = scmp.ne.s32.totalorder %s113, %s115
    %p122 = scmp.eq.s32.totalorder %s21, 1
    %p123 = por %p121, %p122
    %p124 = scmp.ne.s32.totalorder %s115, %s116
    %p125 = scmp.eq.s32.totalorder %s21, 0
    %p126 = por %p124, %p125
    %p127 = scmp.ne.s32.totalorder %s115, %s116
    %p128 = scmp.eq.s32.totalorder %s22, 1
    %p129 = por %p127, %p128
    %p131 = scmp.ne.s32.totalorder %s116, %s130
    %p132 = scmp.eq.s32.totalorder %s22, 0
    %p133 = por %p131, %p132
    %s135 = sadd.s32 %s134, 1
    %p138 = scmp.eq.s32.totalorder %s16, 1
    %p139 = scmp.ne.s32.totalorder %s134, %s136
    %p140 = scmp.eq.s32.totalorder %s16, 0
    %p141 = por %p139, %p140
    %p142 = scmp.ne.s32.totalorder %s134, %s136
    %p143 = scmp.eq.s32.totalorder %s21, 1
    %p144 = por %p142, %p143
    %p145 = scmp.ne.s32.totalorder %s136, %s137
    %p146 = scmp.eq.s32.totalorder %s21, 0
    %p147 = por %p145, %p146
    %p148 = scmp.ne.s32.totalorder %s136, %s137
    %p149 = scmp.eq.s32.totalorder %s22, 1
    %p150 = por %p148, %p149
    %p152 = scmp.ne.s32.totalorder %s137, %s151
    %p153 = scmp.eq.s32.totalorder %s22, 0
    %p154 = por %p152, %p153
    %s156 = sadd.s32 %s155, 1
    %p159 = scmp.eq.s32.totalorder %s16, 1
    %p160 = scmp.ne.s32.totalorder %s155, %s157
    %p161 = scmp.eq.s32.totalorder %s16, 0
    %p162 = por %p160, %p161
    %p163 = scmp.ne.s32.totalorder %s155, %s157
    %p164 = scmp.eq.s32.totalorder %s21, 1
    %p165 = por %p163, %p164
    %p166 = scmp.ne.s32.totalorder %s157, %s158
    %p167 = scmp.eq.s32.totalorder %s21, 0
    %p168 = por %p166, %p167
    %p169 = scmp.ne.s32.totalorder %s157, %s158
    %p170 = scmp.eq.s32.totalorder %s22, 1
    %p171 = por %p169, %p170
    %p173 = scmp.ne.s32.totalorder %s158, %s172
    %p174 = scmp.eq.s32.totalorder %s22, 0
    %p175 = por %p173, %p174
    %s177 = sadd.s32 %s176, 1
    %p180 = scmp.eq.s32.totalorder %s16, 1
    %p181 = scmp.ne.s32.totalorder %s176, %s178
    %p182 = scmp.eq.s32.totalorder %s16, 0
    %p183 = por %p181, %p182
    %p184 = scmp.ne.s32.totalorder %s176, %s178
    %p185 = scmp.eq.s32.totalorder %s21, 1
    %p186 = por %p184, %p185
    %p187 = scmp.ne.s32.totalorder %s178, %s179
    %p188 = scmp.eq.s32.totalorder %s21, 0
    %p189 = por %p187, %p188
    %p190 = scmp.ne.s32.totalorder %s178, %s179
    %p191 = scmp.eq.s32.totalorder %s22, 1
    %p192 = por %p190, %p191
    %p194 = scmp.ne.s32.totalorder %s179, %s193
    %p195 = scmp.eq.s32.totalorder %s22, 0
    %p196 = por %p194, %p195
    %s198 = sadd.s32 %s197, 1
    %p201 = scmp.eq.s32.totalorder %s16, 1
    %p202 = scmp.ne.s32.totalorder %s197, %s199
    %p203 = scmp.eq.s32.totalorder %s16, 0
    %p204 = por %p202, %p203
    %p205 = scmp.ne.s32.totalorder %s197, %s199
    %p206 = scmp.eq.s32.totalorder %s21, 1
    %p207 = por %p205, %p206
    %p208 = scmp.ne.s32.totalorder %s199, %s200
    %p209 = scmp.eq.s32.totalorder %s21, 0
    %p210 = por %p208, %p209
    %p211 = scmp.ne.s32.totalorder %s199, %s200
    %p212 = scmp.eq.s32.totalorder %s22, 1
    %p213 = por %p211, %p212
    %p215 = scmp.ne.s32.totalorder %s200, %s214
    %p216 = scmp.eq.s32.totalorder %s22, 0
    %p217 = por %p215, %p216
    %s219 = sadd.s32 %s218, 1
    %p222 = scmp.eq.s32.totalorder %s16, 1
    %p223 = scmp.ne.s32.totalorder %s218, %s220
    %p224 = scmp.eq.s32.totalorder %s16, 0
    %p225 = por %p223, %p224
    %p226 = scmp.ne.s32.totalorder %s218, %s220
    %p227 = scmp.eq.s32.totalorder %s21, 1
    %p228 = por %p226, %p227
    %p229 = scmp.ne.s32.totalorder %s220, %s221
    %p230 = scmp.eq.s32.totalorder %s21, 0
    %p231 = por %p229, %p230
    %p232 = scmp.ne.s32.totalorder %s220, %s221
    %p233 = scmp.eq.s32.totalorder %s22, 1
    %p234 = por %p232, %p233
    %p236 = scmp.ne.s32.totalorder %s221, %s235
    %p237 = scmp.eq.s32.totalorder %s22, 0
    %p238 = por %p236, %p237
    %s239 = ssub.s32 %s16, %s23
    %p240 = scmp.eq.s32.totalorder %s239, 0
    %s242 = sadd.s32 %s241, 1
    %s243 = scalar_select %p240, %s241, %s242
    %p246 = pneg %p240
    %p247 = scmp.eq.s32.totalorder %s16, 1
    %p248 = por %p246, %p247
    %p249 = scmp.ne.s32.totalorder %s241, %s244
    %p250 = scmp.eq.s32.totalorder %s16, 0
    %p251 = por %p249, %p250
    %p252 = scmp.ne.s32.totalorder %s241, %s244
    %p253 = scmp.eq.s32.totalorder %s21, 1
    %p254 = por %p252, %p253
    %p255 = scmp.ne.s32.totalorder %s244, %s245
    %p256 = scmp.eq.s32.totalorder %s21, 0
    %p257 = por %p255, %p256
    %p258 = scmp.ne.s32.totalorder %s244, %s245
    %p259 = scmp.eq.s32.totalorder %s22, 1
    %p260 = por %p258, %p259
    %p262 = scmp.ne.s32.totalorder %s245, %s261
    %p263 = scmp.eq.s32.totalorder %s22, 0
    %p264 = por %p262, %p263
    %p265 = scmp.le.s32.totalorder 1, %s16
    %p266 = scmp.lt.s32.totalorder %s16, 3
    %p267 = pnand %p265, %p266
    %p268 = pneg %p267
    // Predicated region
    $region9: #{rdb_forward.1} parent=5 // pred_check
      _
    $region10: #{rdb_forward.1} parent=5 // pred_check_branch
      %270 = sbr.rel (%p267) target = $region12
    $region11: #{rdb_forward.1} parent=5 // pred_region
      %s271 = ssub.s32 %s16, 1
      // Predicated region
      $region13: #{rdb_forward.1} parent=11 // pred_check
        %p272 = pneg %p63
      $region14: #{rdb_forward.1} parent=11 // pred_check_branch
        %274 = sbr.rel (%p272) target = $region16
      $region15: #{rdb_forward.1} parent=11 // pred_region
        _
      $region16: #{rdb_forward.1} parent=11 // pred_fallthru
        _
      // Predicated region
      $region17: #{rdb_forward.1} parent=11 // pred_check
        %p275 = pneg %p84
      $region18: #{rdb_forward.1} parent=11 // pred_check_branch
        %277 = sbr.rel (%p275) target = $region20
      $region19: #{rdb_forward.1} parent=11 // pred_region
        _
      $region20: #{rdb_forward.1} parent=11 // pred_fallthru
        _
      // Predicated region
      $region21: #{rdb_forward.1} parent=11 // pred_check
        %p278 = pneg %p105
      $region22: #{rdb_forward.1} parent=11 // pred_check_branch
        %280 = sbr.rel (%p278) target = $region24
      $region23: #{rdb_forward.1} parent=11 // pred_region
        _
      $region24: #{rdb_forward.1} parent=11 // pred_fallthru
        _
      // Predicated region
      $region25: #{rdb_forward.1} parent=11 // pred_check
        %p281 = pneg %p126
      $region26: #{rdb_forward.1} parent=11 // pred_check_branch
        %283 = sbr.rel (%p281) target = $region28
      $region27: #{rdb_forward.1} parent=11 // pred_region
        _
      $region28: #{rdb_forward.1} parent=11 // pred_fallthru
        _
      // Predicated region
      $region29: #{rdb_forward.1} parent=11 // pred_check
        %p284 = pneg %p147
      $region30: #{rdb_forward.1} parent=11 // pred_check_branch
        %286 = sbr.rel (%p284) target = $region32
      $region31: #{rdb_forward.1} parent=11 // pred_region
        _
      $region32: #{rdb_forward.1} parent=11 // pred_fallthru
        _
      // Predicated region
      $region33: #{rdb_forward.1} parent=11 // pred_check
        %p287 = pneg %p168
      $region34: #{rdb_forward.1} parent=11 // pred_check_branch
        %289 = sbr.rel (%p287) target = $region36
      $region35: #{rdb_forward.1} parent=11 // pred_region
        _
      $region36: #{rdb_forward.1} parent=11 // pred_fallthru
        _
      // Predicated region
      $region37: #{rdb_forward.1} parent=11 // pred_check
        %p290 = pneg %p189
      $region38: #{rdb_forward.1} parent=11 // pred_check_branch
        %292 = sbr.rel (%p290) target = $region40
      $region39: #{rdb_forward.1} parent=11 // pred_region
        _
      $region40: #{rdb_forward.1} parent=11 // pred_fallthru
        _
      // Predicated region
      $region41: #{rdb_forward.1} parent=11 // pred_check
        %p293 = pneg %p210
      $region42: #{rdb_forward.1} parent=11 // pred_check_branch
        %295 = sbr.rel (%p293) target = $region44
      $region43: #{rdb_forward.1} parent=11 // pred_region
        _
      $region44: #{rdb_forward.1} parent=11 // pred_fallthru
        _
      // Predicated region
      $region45: #{rdb_forward.1} parent=11 // pred_check
        %p296 = pneg %p231
      $region46: #{rdb_forward.1} parent=11 // pred_check_branch
        %298 = sbr.rel (%p296) target = $region48
      $region47: #{rdb_forward.1} parent=11 // pred_region
        _
      $region48: #{rdb_forward.1} parent=11 // pred_fallthru
        _
    $region12: #{rdb_forward.1} parent=5 // pred_fallthru
      _
    %p299 = scmp.lt.s32.totalorder %s16, 2
    // Predicated region
    $region49: #{rdb_forward.1} parent=5 // pred_check
      %p300 = pneg %p299
    $region50: #{rdb_forward.1} parent=5 // pred_check_branch
      %302 = sbr.rel (%p300) target = $region52
    $region51: #{rdb_forward.1} parent=5 // pred_region
      // Predicated region
      $region53: #{rdb_forward.1} parent=51 // pred_check
        %p303 = pneg %p36
      $region54: #{rdb_forward.1} parent=51 // pred_check_branch
        %305 = sbr.rel (%p303) target = $region56
      $region55: #{rdb_forward.1} parent=51 // pred_region
        %p306 = scmp.lt.s32.totalorder %s16, 1
        %s307 = scalar_select %p306, %s16, 1
        %s308 = smul.addr %s307, 3
        %s309 = smul.addr %s308, 8
        %s310 = scalar_lea.vmem %s0, %s309
      $region56: #{rdb_forward.1} parent=51 // pred_fallthru
        _
    $region52: #{rdb_forward.1} parent=5 // pred_fallthru
      _
    %p311 = scmp.le.s32.totalorder 1, %s16
    %p312 = scmp.lt.s32.totalorder %s16, 3
    %p313 = pnand %p311, %p312
    %p314 = pneg %p313
    // Predicated region
    $region57: #{rdb_forward.1} parent=5 // pred_check
      _
    $region58: #{rdb_forward.1} parent=5 // pred_check_branch
      %316 = sbr.rel (%p313) target = $region60
    $region59: #{rdb_forward.1} parent=5 // pred_region
      %s317 = ssub.s32 %s16, 1
      %p318 = scmp.lt.s32.totalorder %s21, 1
      %s319 = scalar_select %p318, %s21, 1
      %s320 = smul.addr %s319, 3
      %s321 = smul.addr %s320, 8
      %s322 = scalar_lea.vmem %s0, %s321
      %p323 = pneg %p42
      %p324 = pneg %p39
      %p325 = pneg %p63
      %p326 = pneg %p60
      %p327 = pneg %p84
      %p328 = pneg %p81
      %p329 = pneg %p105
      %p330 = pneg %p102
      %p331 = pneg %p126
      %p332 = pneg %p123
      %p333 = pneg %p147
      %p334 = pneg %p144
      %p335 = pneg %p168
      %p336 = pneg %p165
      %p337 = pneg %p189
      %p338 = pneg %p186
      %p339 = pneg %p210
      %p340 = pneg %p207
      %p341 = pneg %p231
      %p342 = pneg %p228
      %p343 = pneg %p257
      %p344 = pneg %p254
      %p345 = scmp.lt.s32.totalorder %s21, 1
      %s346 = scalar_select %p345, %s21, 1
      %s347 = smul.addr %s346, 3
      %s348 = smul.addr %s347, 8
      %s349 = scalar_lea.vmem %s10, %s348
      %p350 = scmp.lt.s32.totalorder %s21, 1
      %s351 = scalar_select %p350, %s21, 1
      %s352 = smul.addr %s351, 3
      %s353 = smul.addr %s352, 8
      %s354 = scalar_lea.vmem %s0, %s353
      %p355 = scmp.lt.s32.totalorder %s21, 1
      %s356 = scalar_select %p355, %s21, 1
      %s357 = smul.addr %s356, 3
      %s358 = smul.addr %s357, 8
      %s359 = scalar_lea.vmem %s10, %s358
      %v360 = vld [vmem:[%s354] sm:$0xff]
      %v361 = vld [vmem:[%s354 + $0x8] sm:$0xff]
      %v362 = vld [vmem:[%s354 + $0x10] sm:$0xff]
      %363 = vst [vmem:[#allocation2] sm:$0xff] %v360
      %364 = vst [vmem:[#allocation2 + $0x8] sm:$0xff] %v361
      %365 = vst [vmem:[#allocation2 + $0x10] sm:$0xff] %v362
      %v366 = vld [vmem:[%s1] sm:$0x7]
      %v367 = vld [vmem:[#allocation2] sm:$0xff]
      %v368 = vld [vmem:[#allocation2 + $0x8] sm:$0xff]
      %v369 = vld [vmem:[#allocation2 + $0x10] sm:$0xff]
      %v370 = vld [vmem:[%s2] sm:$0xff]
      %v371 = vld [vmem:[%s2 + $0x8] sm:$0xff]
      %v372 = vld [vmem:[%s2 + $0x10] sm:$0xff]
      %v373 = vld [vmem:[%s2 + $0x18] sm:$0xff]
      %v374 = vld [vmem:[%s2 + $0x20] sm:$0xff]
      %v375 = vld [vmem:[%s2 + $0x28] sm:$0xff]
      %v376 = vld [vmem:[%s2 + $0x30] sm:$0xff]
      %v377 = vld [vmem:[%s2 + $0x38] sm:$0xff]
      %v378 = vld [vmem:[%s2 + $0x40] sm:$0xff]
      %vm379 = vcmask 64512
      %v381 = vsel %vm379, %v370, 0
      %v384 = vsel %vm379, %v371, 0
      %v387 = vsel %vm379, %v372, 0
      %v390 = vsel %vm379, %v373, 0
      %v393 = vsel %vm379, %v374, 0
      %v396 = vsel %vm379, %v375, 0
      %v399 = vsel %vm379, %v376, 0
      %v402 = vsel %vm379, %v377, 0
      %v405 = vsel %vm379, %v378, 0
      %407 = vmatprep.subr.mxu0 %v368
      %408 = vmatpush1.msra.mxu0 %v367
      %409 = vmatprep.subr.mxu0 0.0
      %410 = vmatpush1.msra.mxu0 0.0
      %411 = vmatprep.subr.mxu0 0.0
      %412 = vmatpush1.msra.mxu0 0.0
      %413 = vmatprep.subr.mxu0 0.0
      %414 = vmatpush1.msra.mxu0 0.0
      %415 = vmatprep.subr.mxu0 0.0
      %416 = vmatpush1.msra.mxu0 0.0
      %417 = vmatprep.subr.mxu0 0.0
      %418 = vmatpush1.msra.mxu0 0.0
      %419 = vmatprep.subr.mxu0 0.0
      %420 = vmatpush1.msra.mxu0 0.0
      %421 = vmatprep.subr.mxu0 0.0
      %422 = vmatpush1.msra.mxu0 0.0
      %423 = vmatprep.subr.mxu0 0.0
      %424 = vmatpush1.msra.mxu0 0.0
      %425 = vmatprep.subr.mxu0 0.0
      %426 = vmatpush1.msra.mxu0 0.0
      %427 = vmatprep.subr.mxu0 0.0
      %428 = vmatpush1.msra.mxu0 0.0
      %429 = vmatprep.subr.mxu0 0.0
      %430 = vmatpush1.msra.mxu0 0.0
      %431 = vmatprep.subr.mxu0 0.0
      %432 = vmatpush1.msra.mxu0 0.0
      %433 = vmatprep.subr.mxu0 0.0
      %434 = vmatpush1.msra.mxu0 0.0
      %435 = vmatprep.subr.mxu0 0.0
      %436 = vmatpush1.msra.mxu0 0.0
      %437 = vmatprep.subr.mxu0 0.0
      %438 = vmatpush1.msra.mxu0 0.0
      %439 = vmatprep.subr.mxu0 0.0
      %440 = vmatpush1.msra.mxu0 0.0
      %441 = vmatprep.subr.mxu0 0.0
      %442 = vmatpush1.msra.mxu0 0.0
      %443 = vmatprep.subr.mxu0 0.0
      %444 = vmatpush1.msra.mxu0 0.0
      %445 = vmatprep.subr.mxu0 0.0
      %446 = vmatpush1.msra.mxu0 0.0
      %447 = vmatprep.subr.mxu0 0.0
      %448 = vmatpush1.msra.mxu0 0.0
      %449 = vmatprep.subr.mxu0 0.0
      %450 = vmatpush1.msra.mxu0 0.0
      %451 = vmatprep.subr.mxu0 0.0
      %452 = vmatpush1.msra.mxu0 0.0
      %453 = vmatprep.subr.mxu0 0.0
      %454 = vmatpush1.msra.mxu0 0.0
      %455 = vmatprep.subr.mxu0 0.0
      %456 = vmatpush1.msra.mxu0 0.0
      %457 = vmatprep.subr.mxu0 0.0
      %458 = vmatpush1.msra.mxu0 0.0
      %459 = vmatprep.subr.mxu0 0.0
      %460 = vmatpush1.msra.mxu0 0.0
      %461 = vmatprep.subr.mxu0 0.0
      %462 = vmatpush1.msra.mxu0 0.0
      %463 = vmatprep.subr.mxu0 0.0
      %464 = vmatpush1.msra.mxu0 0.0
      %465 = vmatprep.subr.mxu0 0.0
      %466 = vmatpush1.msra.mxu0 0.0
      %467 = vmatprep.subr.mxu0 0.0
      %468 = vmatpush1.msra.mxu0 0.0
      %469 = vmatprep.subr.mxu0 0.0
      %470 = vmatpush1.msra.mxu0 0.0
      %471 = vmatprep.mubr.f32.mxu0 0.0
      %472 = vmatmul.mubr.f32.gmra.mrb[0].mxu0 %v381
      %v473 = vpop.f32.mrb[0].mxu0
      %v474 = vadd.f32 0.0, %v473
      %v475 = vpop.f32.mrb[0].mxu0
      %v476 = vadd.f32 0.0, %v475
      %477 = vmatprep.mubr.f32.mxu0 0.0
      %478 = vmatmul.mubr.f32.gmra.mrb[0].mxu0 %v384
      %v479 = vpop.f32.mrb[0].mxu0
      %v480 = vadd.f32 0.0, %v479
      %v481 = vpop.f32.mrb[0].mxu0
      %v482 = vadd.f32 0.0, %v481
      %483 = vmatprep.mubr.f32.mxu0 0.0
      %484 = vmatmul.mubr.f32.gmra.mrb[0].mxu0 %v387
      %v485 = vpop.f32.mrb[0].mxu0
      %v486 = vadd.f32 0.0, %v485
      %v487 = vpop.f32.mrb[0].mxu0
      %v488 = vadd.f32 0.0, %v487
      %489 = vmatprep.mubr.f32.mxu0 0.0
      %490 = vmatmul.mubr.f32.gmra.mrb[0].mxu0 %v390
      %v491 = vpop.f32.mrb[0].mxu0
      %v492 = vadd.f32 0.0, %v491
      %v493 = vpop.f32.mrb[0].mxu0
      %v494 = vadd.f32 0.0, %v493
      %495 = vmatprep.mubr.f32.mxu0 0.0
      %496 = vmatmul.mubr.f32.gmra.mrb[0].mxu0 %v393
      %v497 = vpop.f32.mrb[0].mxu0
      %v498 = vadd.f32 0.0, %v497
      %v499 = vpop.f32.mrb[0].mxu0
      %v500 = vadd.f32 0.0, %v499
      %501 = vmatprep.mubr.f32.mxu0 0.0
      %502 = vmatmul.mubr.f32.gmra.mrb[0].mxu0 %v396
      %v503 = vpop.f32.mrb[0].mxu0
      %v504 = vadd.f32 0.0, %v503
      %v505 = vpop.f32.mrb[0].mxu0
      %v506 = vadd.f32 0.0, %v505
      %507 = vmatprep.mubr.f32.mxu0 0.0
      %508 = vmatmul.mubr.f32.gmra.mrb[0].mxu0 %v399
      %v509 = vpop.f32.mrb[0].mxu0
      %v510 = vadd.f32 0.0, %v509
      %v511 = vpop.f32.mrb[0].mxu0
      %v512 = vadd.f32 0.0, %v511
      %513 = vmatprep.mubr.f32.mxu0 0.0
      %514 = vmatmul.mubr.f32.gmra.mrb[0].mxu0 %v402
      %v515 = vpop.f32.mrb[0].mxu0
      %v516 = vadd.f32 0.0, %v515
      %v517 = vpop.f32.mrb[0].mxu0
      %v518 = vadd.f32 0.0, %v517
      %519 = vmatprep.mubr.f32.mxu0 0.0
      %520 = vmatmul.mubr.f32.gmra.mrb[0].mxu0 %v405
      %v521 = vpop.f32.mrb[0].mxu0
      %v522 = vadd.f32 0.0, %v521
      %v523 = vpop.f32.mrb[0].mxu0
      %v524 = vadd.f32 0.0, %v523
      %525 = vdwg.mxu0
      %526 = vmatprep.subr.mxu0 0.0
      %527 = vmatpush1.msra.mxu0 %v369
      %528 = vmatprep.subr.mxu0 0.0
      %529 = vmatpush1.msra.mxu0 0.0
      %530 = vmatprep.subr.mxu0 0.0
      %531 = vmatpush1.msra.mxu0 0.0
      %532 = vmatprep.subr.mxu0 0.0
      %533 = vmatpush1.msra.mxu0 0.0
      %534 = vmatprep.subr.mxu0 0.0
      %535 = vmatpush1.msra.mxu0 0.0
      %536 = vmatprep.subr.mxu0 0.0
      %537 = vmatpush1.msra.mxu0 0.0
      %538 = vmatprep.subr.mxu0 0.0
      %539 = vmatpush1.msra.mxu0 0.0
      %540 = vmatprep.subr.mxu0 0.0
      %541 = vmatpush1.msra.mxu0 0.0
      %542 = vmatprep.subr.mxu0 0.0
      %543 = vmatpush1.msra.mxu0 0.0
      %544 = vmatprep.subr.mxu0 0.0
      %545 = vmatpush1.msra.mxu0 0.0
      %546 = vmatprep.subr.mxu0 0.0
      %547 = vmatpush1.msra.mxu0 0.0
      %548 = vmatprep.subr.mxu0 0.0
      %549 = vmatpush1.msra.mxu0 0.0
      %550 = vmatprep.subr.mxu0 0.0
      %551 = vmatpush1.msra.mxu0 0.0
      %552 = vmatprep.subr.mxu0 0.0
      %553 = vmatpush1.msra.mxu0 0.0
      %554 = vmatprep.subr.mxu0 0.0
      %555 = vmatpush1.msra.mxu0 0.0
      %556 = vmatprep.subr.mxu0 0.0
      %557 = vmatpush1.msra.mxu0 0.0
      %558 = vmatprep.subr.mxu0 0.0
      %559 = vmatpush1.msra.mxu0 0.0
      %560 = vmatprep.subr.mxu0 0.0
      %561 = vmatpush1.msra.mxu0 0.0
      %562 = vmatprep.subr.mxu0 0.0
      %563 = vmatpush1.msra.mxu0 0.0
      %564 = vmatprep.subr.mxu0 0.0
      %565 = vmatpush1.msra.mxu0 0.0
      %566 = vmatprep.subr.mxu0 0.0
      %567 = vmatpush1.msra.mxu0 0.0
      %568 = vmatprep.subr.mxu0 0.0
      %569 = vmatpush1.msra.mxu0 0.0
      %570 = vmatprep.subr.mxu0 0.0
      %571 = vmatpush1.msra.mxu0 0.0
      %572 = vmatprep.subr.mxu0 0.0
      %573 = vmatpush1.msra.mxu0 0.0
      %574 = vmatprep.subr.mxu0 0.0
      %575 = vmatpush1.msra.mxu0 0.0
      %576 = vmatprep.subr.mxu0 0.0
      %577 = vmatpush1.msra.mxu0 0.0
      %578 = vmatprep.subr.mxu0 0.0
      %579 = vmatpush1.msra.mxu0 0.0
      %580 = vmatprep.subr.mxu0 0.0
      %581 = vmatpush1.msra.mxu0 0.0
      %582 = vmatprep.subr.mxu0 0.0
      %583 = vmatpush1.msra.mxu0 0.0
      %584 = vmatprep.subr.mxu0 0.0
      %585 = vmatpush1.msra.mxu0 0.0
      %586 = vmatprep.subr.mxu0 0.0
      %587 = vmatpush1.msra.mxu0 0.0
      %588 = vmatprep.subr.mxu0 0.0
      %589 = vmatpush1.msra.mxu0 0.0
      %590 = vmatprep.mubr.f32.mxu0 0.0
      %591 = vmatmul.mubr.f32.gmra.mrb[0].mxu0 %v381
      %v592 = vpop.f32.mrb[0].mxu0
      %v593 = vadd.f32 0.0, %v592
      %v594 = vpop.f32.mrb[0].mxu0
      %595 = vmatprep.mubr.f32.mxu0 0.0
      %596 = vmatmul.mubr.f32.gmra.mrb[0].mxu0 %v384
      %v597 = vpop.f32.mrb[0].mxu0
      %v598 = vadd.f32 0.0, %v597
      %v599 = vpop.f32.mrb[0].mxu0
      %600 = vmatprep.mubr.f32.mxu0 0.0
      %601 = vmatmul.mubr.f32.gmra.mrb[0].mxu0 %v387
      %v602 = vpop.f32.mrb[0].mxu0
      %v603 = vadd.f32 0.0, %v602
      %v604 = vpop.f32.mrb[0].mxu0
      %605 = vmatprep.mubr.f32.mxu0 0.0
      %606 = vmatmul.mubr.f32.gmra.mrb[0].mxu0 %v390
      %v607 = vpop.f32.mrb[0].mxu0
      %v608 = vadd.f32 0.0, %v607
      %v609 = vpop.f32.mrb[0].mxu0
      %610 = vmatprep.mubr.f32.mxu0 0.0
      %611 = vmatmul.mubr.f32.gmra.mrb[0].mxu0 %v393
      %v612 = vpop.f32.mrb[0].mxu0
      %v613 = vadd.f32 0.0, %v612
      %v614 = vpop.f32.mrb[0].mxu0
      %615 = vmatprep.mubr.f32.mxu0 0.0
      %616 = vmatmul.mubr.f32.gmra.mrb[0].mxu0 %v396
      %v617 = vpop.f32.mrb[0].mxu0
      %v618 = vadd.f32 0.0, %v617
      %v619 = vpop.f32.mrb[0].mxu0
      %620 = vmatprep.mubr.f32.mxu0 0.0
      %621 = vmatmul.mubr.f32.gmra.mrb[0].mxu0 %v399
      %v622 = vpop.f32.mrb[0].mxu0
      %v623 = vadd.f32 0.0, %v622
      %v624 = vpop.f32.mrb[0].mxu0
      %625 = vmatprep.mubr.f32.mxu0 0.0
      %626 = vmatmul.mubr.f32.gmra.mrb[0].mxu0 %v402
      %v627 = vpop.f32.mrb[0].mxu0
      %v628 = vadd.f32 0.0, %v627
      %v629 = vpop.f32.mrb[0].mxu0
      %630 = vmatprep.mubr.f32.mxu0 0.0
      %631 = vmatmul.mubr.f32.gmra.mrb[0].mxu0 %v405
      %v632 = vpop.f32.mrb[0].mxu0
      %v633 = vadd.f32 0.0, %v632
      %v634 = vpop.f32.mrb[0].mxu0
      %635 = vdwg.mxu0
      %v636 = vld [vmem:[%s3] sm:$0xff]
      %638 = vset.pattern.permute.xlu0 0
      %639 = vperm.xlu0 %638, %v636
      %v640 = vpop.permute.xlu0 %639
      %642 = vrot.lane.b32.xlu0 %v474, 19
      %v643 = vpop.permute.xlu0 %642
      %644 = vrot.lane.b32.xlu0 %v476, 19
      %v645 = vpop.permute.xlu0 %644
      %646 = vrot.lane.b32.xlu0 %v593, 19
      %v647 = vpop.permute.xlu0 %646
      %v648 = vlaneseq
      %v649 = vand.u32 %v648, 127
      %vm650 = vcmp.lt.s32.totalorder %v649, 19
      %v651 = vsel %vm650, %v645, %v647
      %v652 = vsel %vm650, %v643, %v645
      %v653 = vsel %vm650, %v647, %v643
      %v654 = vadd.f32 %v640, %v653
      %v655 = vadd.f32 %v640, %v652
      %v656 = vadd.f32 %v640, %v651
      %657 = vrot.lane.b32.xlu0 %v480, 18
      %v658 = vpop.permute.xlu0 %657
      %659 = vrot.lane.b32.xlu0 %v482, 18
      %v660 = vpop.permute.xlu0 %659
      %661 = vrot.lane.b32.xlu0 %v598, 18
      %v662 = vpop.permute.xlu0 %661
      %vm663 = vcmp.lt.s32.totalorder %v649, 18
      %v664 = vsel %vm663, %v660, %v662
      %v665 = vsel %vm663, %v658, %v660
      %v666 = vsel %vm663, %v662, %v658
      %v667 = vadd.f32 %v654, %v666
      %v668 = vadd.f32 %v655, %v665
      %v669 = vadd.f32 %v656, %v664
      %670 = vrot.lane.b32.xlu0 %v486, 17
      %v671 = vpop.permute.xlu0 %670
      %672 = vrot.lane.b32.xlu0 %v488, 17
      %v673 = vpop.permute.xlu0 %672
      %674 = vrot.lane.b32.xlu0 %v603, 17
      %v675 = vpop.permute.xlu0 %674
      %vm676 = vcmp.lt.s32.totalorder %v649, 17
      %v677 = vsel %vm676, %v673, %v675
      %v678 = vsel %vm676, %v671, %v673
      %v679 = vsel %vm676, %v675, %v671
      %v680 = vadd.f32 %v667, %v679
      %v681 = vadd.f32 %v668, %v678
      %v682 = vadd.f32 %v669, %v677
      %683 = vrot.lane.b32.xlu0 %v492, 1
      %v684 = vpop.permute.xlu0 %683
      %685 = vrot.lane.b32.xlu0 %v494, 1
      %v686 = vpop.permute.xlu0 %685
      %687 = vrot.lane.b32.xlu0 %v608, 1
      %v688 = vpop.permute.xlu0 %687
      %vm689 = vcmp.lt.s32.totalorder %v649, 1
      %v690 = vsel %vm689, %v686, %v688
      %v691 = vsel %vm689, %v684, %v686
      %v692 = vsel %vm689, %v688, %v684
      %v693 = vadd.f32 %v680, %v692
      %v694 = vadd.f32 %v681, %v691
      %v695 = vadd.f32 %v682, %v690
      %v696 = vadd.f32 %v693, %v498
      %v697 = vadd.f32 %v694, %v500
      %v698 = vadd.f32 %v695, %v613
      %699 = vrot.lane.b32.xlu0 %v504, 127
      %v700 = vpop.permute.xlu0 %699
      %701 = vrot.lane.b32.xlu0 %v506, 127
      %v702 = vpop.permute.xlu0 %701
      %703 = vrot.lane.b32.xlu0 %v618, 127
      %v704 = vpop.permute.xlu0 %703
      %vm705 = vcmp.lt.s32.totalorder %v649, 127
      %v706 = vsel %vm705, %v702, %v704
      %v707 = vsel %vm705, %v700, %v702
      %v708 = vsel %vm705, %v704, %v700
      %v709 = vadd.f32 %v696, %v707
      %v710 = vadd.f32 %v697, %v706
      %v711 = vadd.f32 %v698, %v708
      %712 = vrot.lane.b32.xlu0 %v510, 111
      %v713 = vpop.permute.xlu0 %712
      %714 = vrot.lane.b32.xlu0 %v512, 111
      %v715 = vpop.permute.xlu0 %714
      %716 = vrot.lane.b32.xlu0 %v623, 111
      %v717 = vpop.permute.xlu0 %716
      %vm718 = vcmp.lt.s32.totalorder %v649, 111
      %v719 = vsel %vm718, %v715, %v717
      %v720 = vsel %vm718, %v713, %v715
      %v721 = vsel %vm718, %v717, %v713
      %v722 = vadd.f32 %v709, %v720
      %v723 = vadd.f32 %v710, %v719
      %v724 = vadd.f32 %v711, %v721
      %725 = vrot.lane.b32.xlu0 %v516, 110
      %v726 = vpop.permute.xlu0 %725
      %727 = vrot.lane.b32.xlu0 %v518, 110
      %v728 = vpop.permute.xlu0 %727
      %729 = vrot.lane.b32.xlu0 %v628, 110
      %v730 = vpop.permute.xlu0 %729
      %vm731 = vcmp.lt.s32.totalorder %v649, 110
      %v732 = vsel %vm731, %v728, %v730
      %v733 = vsel %vm731, %v726, %v728
      %v734 = vsel %vm731, %v730, %v726
      %v735 = vadd.f32 %v722, %v733
      %v736 = vadd.f32 %v723, %v732
      %v737 = vadd.f32 %v724, %v734
      %738 = vrot.lane.b32.xlu0 %v522, 109
      %v739 = vpop.permute.xlu0 %738
      %740 = vrot.lane.b32.xlu0 %v524, 109
      %v741 = vpop.permute.xlu0 %740
      %742 = vrot.lane.b32.xlu0 %v633, 109
      %v743 = vpop.permute.xlu0 %742
      %vm744 = vcmp.lt.s32.totalorder %v649, 109
      %v745 = vsel %vm744, %v741, %v743
      %v746 = vsel %vm744, %v739, %v741
      %v747 = vsel %vm744, %v743, %v739
      %v748 = vadd.f32 %v735, %v746
      %v749 = vadd.f32 %v736, %v745
      %v750 = vadd.f32 %v737, %v747
      %v751 = vmul.f32 %v748, 0.1
      %v752 = vmul.f32 %v749, 0.1
      %v753 = vmul.f32 %v750, 0.1
      %v754 = vmax.f32 %v748, %v751
      %v755 = vmax.f32 %v749, %v752
      %v756 = vmax.f32 %v750, %v753
      %v758 = vlaneseq
      %v759 = vshrl.u32 %v758, 7
      %v760 = vsub.s32 0, %v759
      %v761 = vrot.slane %v366, %v760
      %v762 = vlaneseq
      %v763 = vshrl.u32 %v762, 7
      %v764 = vsub.s32 1, %v763
      %v765 = vrot.slane %v366, %v764
      %v766 = vlaneseq
      %v767 = vshrl.u32 %v766, 7
      %v768 = vsub.s32 2, %v767
      %v769 = vrot.slane %v366, %v768
      %v773 = vmul.f32 %v754, %v761
      %v774 = vmul.f32 %v755, %v765
      %v775 = vmul.f32 %v756, %v769
      %776 = vst [vmem:[#allocation2 + $0x18] sm:$0xff] %v773
      %777 = vst [vmem:[#allocation2 + $0x20] sm:$0xff] %v774
      %778 = vst [vmem:[#allocation2 + $0x28] sm:$0xff] %v775
      %v779 = vld [vmem:[#allocation2] sm:$0xff]
      %v780 = vld [vmem:[#allocation2 + $0x8] sm:$0xff]
      %v781 = vld [vmem:[#allocation2 + $0x10] sm:$0xff]
      %v782 = vld [vmem:[#allocation2 + $0x18] sm:$0xff]
      %v783 = vld [vmem:[#allocation2 + $0x20] sm:$0xff]
      %v784 = vld [vmem:[#allocation2 + $0x28] sm:$0xff]
      %v785 = vld [vmem:[%s4] sm:$0xff]
      %v786 = vld [vmem:[%s4 + $0x8] sm:$0xff]
      %v787 = vld [vmem:[%s4 + $0x10] sm:$0xff]
      %v788 = vld [vmem:[%s4 + $0x18] sm:$0xff]
      %v789 = vld [vmem:[%s4 + $0x20] sm:$0xff]
      %v790 = vld [vmem:[%s4 + $0x28] sm:$0xff]
      %v791 = vld [vmem:[%s4 + $0x30] sm:$0xff]
      %v792 = vld [vmem:[%s4 + $0x38] sm:$0xff]
      %v793 = vld [vmem:[%s4 + $0x40] sm:$0xff]
      %vm794 = vcmask 130048
      %v796 = vsel %vm794, %v785, 0
      %v799 = vsel %vm794, %v786, 0
      %v802 = vsel %vm794, %v787, 0
      %v805 = vsel %vm794, %v788, 0
      %v808 = vsel %vm794, %v789, 0
      %v811 = vsel %vm794, %v790, 0
      %v814 = vsel %vm794, %v791, 0
      %v817 = vsel %vm794, %v792, 0
      %v820 = vsel %vm794, %v793, 0
      %822 = vmatprep.subr.mxu0 %v780
      %823 = vmatpush1.msra.mxu0 %v779
      %824 = vmatprep.subr.mxu0 %v783
      %825 = vmatpush1.msra.mxu0 %v782
      %826 = vmatprep.subr.mxu0 0.0
      %827 = vmatpush1.msra.mxu0 0.0
      %828 = vmatprep.subr.mxu0 0.0
      %829 = vmatpush1.msra.mxu0 0.0
      %830 = vmatprep.subr.mxu0 0.0
      %831 = vmatpush1.msra.mxu0 0.0
      %832 = vmatprep.subr.mxu0 0.0
      %833 = vmatpush1.msra.mxu0 0.0
      %834 = vmatprep.subr.mxu0 0.0
      %835 = vmatpush1.msra.mxu0 0.0
      %836 = vmatprep.subr.mxu0 0.0
      %837 = vmatpush1.msra.mxu0 0.0
      %838 = vmatprep.subr.mxu0 0.0
      %839 = vmatpush1.msra.mxu0 0.0
      %840 = vmatprep.subr.mxu0 0.0
      %841 = vmatpush1.msra.mxu0 0.0
      %842 = vmatprep.subr.mxu0 0.0
      %843 = vmatpush1.msra.mxu0 0.0
      %844 = vmatprep.subr.mxu0 0.0
      %845 = vmatpush1.msra.mxu0 0.0
      %846 = vmatprep.subr.mxu0 0.0
      %847 = vmatpush1.msra.mxu0 0.0
      %848 = vmatprep.subr.mxu0 0.0
      %849 = vmatpush1.msra.mxu0 0.0
      %850 = vmatprep.subr.mxu0 0.0
      %851 = vmatpush1.msra.mxu0 0.0
      %852 = vmatprep.subr.mxu0 0.0
      %853 = vmatpush1.msra.mxu0 0.0
      %854 = vmatprep.subr.mxu0 0.0
      %855 = vmatpush1.msra.mxu0 0.0
      %856 = vmatprep.subr.mxu0 0.0
      %857 = vmatpush1.msra.mxu0 0.0
      %858 = vmatprep.subr.mxu0 0.0
      %859 = vmatpush1.msra.mxu0 0.0
      %860 = vmatprep.subr.mxu0 0.0
      %861 = vmatpush1.msra.mxu0 0.0
      %862 = vmatprep.subr.mxu0 0.0
      %863 = vmatpush1.msra.mxu0 0.0
      %864 = vmatprep.subr.mxu0 0.0
      %865 = vmatpush1.msra.mxu0 0.0
      %866 = vmatprep.subr.mxu0 0.0
      %867 = vmatpush1.msra.mxu0 0.0
      %868 = vmatprep.subr.mxu0 0.0
      %869 = vmatpush1.msra.mxu0 0.0
      %870 = vmatprep.subr.mxu0 0.0
      %871 = vmatpush1.msra.mxu0 0.0
      %872 = vmatprep.subr.mxu0 0.0
      %873 = vmatpush1.msra.mxu0 0.0
      %874 = vmatprep.subr.mxu0 0.0
      %875 = vmatpush1.msra.mxu0 0.0
      %876 = vmatprep.subr.mxu0 0.0
      %877 = vmatpush1.msra.mxu0 0.0
      %878 = vmatprep.subr.mxu0 0.0
      %879 = vmatpush1.msra.mxu0 0.0
      %880 = vmatprep.subr.mxu0 0.0
      %881 = vmatpush1.msra.mxu0 0.0
      %882 = vmatprep.subr.mxu0 0.0
      %883 = vmatpush1.msra.mxu0 0.0
      %884 = vmatprep.subr.mxu0 0.0
      %885 = vmatpush1.msra.mxu0 0.0
      %886 = vmatprep.mubr.f32.mxu0 0.0
      %887 = vmatmul.mubr.f32.gmra.mrb[0].mxu0 %v796
      %v888 = vpop.f32.mrb[0].mxu0
      %v889 = vadd.f32 0.0, %v888
      %v890 = vpop.f32.mrb[0].mxu0
      %v891 = vadd.f32 0.0, %v890
      %892 = vmatprep.mubr.f32.mxu0 0.0
      %893 = vmatmul.mubr.f32.gmra.mrb[0].mxu0 %v799
      %v894 = vpop.f32.mrb[0].mxu0
      %v895 = vadd.f32 0.0, %v894
      %v896 = vpop.f32.mrb[0].mxu0
      %v897 = vadd.f32 0.0, %v896
      %898 = vmatprep.mubr.f32.mxu0 0.0
      %899 = vmatmul.mubr.f32.gmra.mrb[0].mxu0 %v802
      %v900 = vpop.f32.mrb[0].mxu0
      %v901 = vadd.f32 0.0, %v900
      %v902 = vpop.f32.mrb[0].mxu0
      %v903 = vadd.f32 0.0, %v902
      %904 = vmatprep.mubr.f32.mxu0 0.0
      %905 = vmatmul.mubr.f32.gmra.mrb[0].mxu0 %v805
      %v906 = vpop.f32.mrb[0].mxu0
      %v907 = vadd.f32 0.0, %v906
      %v908 = vpop.f32.mrb[0].mxu0
      %v909 = vadd.f32 0.0, %v908
      %910 = vmatprep.mubr.f32.mxu0 0.0
      %911 = vmatmul.mubr.f32.gmra.mrb[0].mxu0 %v808
      %v912 = vpop.f32.mrb[0].mxu0
      %v913 = vadd.f32 0.0, %v912
      %v914 = vpop.f32.mrb[0].mxu0
      %v915 = vadd.f32 0.0, %v914
      %916 = vmatprep.mubr.f32.mxu0 0.0
      %917 = vmatmul.mubr.f32.gmra.mrb[0].mxu0 %v811
      %v918 = vpop.f32.mrb[0].mxu0
      %v919 = vadd.f32 0.0, %v918
      %v920 = vpop.f32.mrb[0].mxu0
      %v921 = vadd.f32 0.0, %v920
      %922 = vmatprep.mubr.f32.mxu0 0.0
      %923 = vmatmul.mubr.f32.gmra.mrb[0].mxu0 %v814
      %v924 = vpop.f32.mrb[0].mxu0
      %v925 = vadd.f32 0.0, %v924
      %v926 = vpop.f32.mrb[0].mxu0
      %v927 = vadd.f32 0.0, %v926
      %928 = vmatprep.mubr.f32.mxu0 0.0
      %929 = vmatmul.mubr.f32.gmra.mrb[0].mxu0 %v817
      %v930 = vpop.f32.mrb[0].mxu0
      %v931 = vadd.f32 0.0, %v930
      %v932 = vpop.f32.mrb[0].mxu0
      %v933 = vadd.f32 0.0, %v932
      %934 = vmatprep.mubr.f32.mxu0 0.0
      %935 = vmatmul.mubr.f32.gmra.mrb[0].mxu0 %v820
      %v936 = vpop.f32.mrb[0].mxu0
      %v937 = vadd.f32 0.0, %v936
      %v938 = vpop.f32.mrb[0].mxu0
      %v939 = vadd.f32 0.0, %v938
      %940 = vdwg.mxu0
      %941 = vmatprep.subr.mxu0 0.0
      %942 = vmatpush1.msra.mxu0 %v781
      %943 = vmatprep.subr.mxu0 0.0
      %944 = vmatpush1.msra.mxu0 %v784
      %945 = vmatprep.subr.mxu0 0.0
      %946 = vmatpush1.msra.mxu0 0.0
      %947 = vmatprep.subr.mxu0 0.0
      %948 = vmatpush1.msra.mxu0 0.0
      %949 = vmatprep.subr.mxu0 0.0
      %950 = vmatpush1.msra.mxu0 0.0
      %951 = vmatprep.subr.mxu0 0.0
      %952 = vmatpush1.msra.mxu0 0.0
      %953 = vmatprep.subr.mxu0 0.0
      %954 = vmatpush1.msra.mxu0 0.0
      %955 = vmatprep.subr.mxu0 0.0
      %956 = vmatpush1.msra.mxu0 0.0
      %957 = vmatprep.subr.mxu0 0.0
      %958 = vmatpush1.msra.mxu0 0.0
      %959 = vmatprep.subr.mxu0 0.0
      %960 = vmatpush1.msra.mxu0 0.0
      %961 = vmatprep.subr.mxu0 0.0
      %962 = vmatpush1.msra.mxu0 0.0
      %963 = vmatprep.subr.mxu0 0.0
      %964 = vmatpush1.msra.mxu0 0.0
      %965 = vmatprep.subr.mxu0 0.0
      %966 = vmatpush1.msra.mxu0 0.0
      %967 = vmatprep.subr.mxu0 0.0
      %968 = vmatpush1.msra.mxu0 0.0
      %969 = vmatprep.subr.mxu0 0.0
      %970 = vmatpush1.msra.mxu0 0.0
      %971 = vmatprep.subr.mxu0 0.0
      %972 = vmatpush1.msra.mxu0 0.0
      %973 = vmatprep.subr.mxu0 0.0
      %974 = vmatpush1.msra.mxu0 0.0
      %975 = vmatprep.subr.mxu0 0.0
      %976 = vmatpush1.msra.mxu0 0.0
      %977 = vmatprep.subr.mxu0 0.0
      %978 = vmatpush1.msra.mxu0 0.0
      %979 = vmatprep.subr.mxu0 0.0
      %980 = vmatpush1.msra.mxu0 0.0
      %981 = vmatprep.subr.mxu0 0.0
      %982 = vmatpush1.msra.mxu0 0.0
      %983 = vmatprep.subr.mxu0 0.0
      %984 = vmatpush1.msra.mxu0 0.0
      %985 = vmatprep.subr.mxu0 0.0
      %986 = vmatpush1.msra.mxu0 0.0
      %987 = vmatprep.subr.mxu0 0.0
      %988 = vmatpush1.msra.mxu0 0.0
      %989 = vmatprep.subr.mxu0 0.0
      %990 = vmatpush1.msra.mxu0 0.0
      %991 = vmatprep.subr.mxu0 0.0
      %992 = vmatpush1.msra.mxu0 0.0
      %993 = vmatprep.subr.mxu0 0.0
      %994 = vmatpush1.msra.mxu0 0.0
      %995 = vmatprep.subr.mxu0 0.0
      %996 = vmatpush1.msra.mxu0 0.0
      %997 = vmatprep.subr.mxu0 0.0
      %998 = vmatpush1.msra.mxu0 0.0
      %999 = vmatprep.subr.mxu0 0.0
      %1000 = vmatpush1.msra.mxu0 0.0
      %1001 = vmatprep.subr.mxu0 0.0
      %1002 = vmatpush1.msra.mxu0 0.0
      %1003 = vmatprep.subr.mxu0 0.0
      %1004 = vmatpush1.msra.mxu0 0.0
      %1005 = vmatprep.mubr.f32.mxu0 0.0
      %1006 = vmatmul.mubr.f32.gmra.mrb[0].mxu0 %v796
      %v1007 = vpop.f32.mrb[0].mxu0
      %v1008 = vadd.f32 0.0, %v1007
      %v1009 = vpop.f32.mrb[0].mxu0
      %1010 = vmatprep.mubr.f32.mxu0 0.0
      %1011 = vmatmul.mubr.f32.gmra.mrb[0].mxu0 %v799
      %v1012 = vpop.f32.mrb[0].mxu0
      %v1013 = vadd.f32 0.0, %v1012
      %v1014 = vpop.f32.mrb[0].mxu0
      %1015 = vmatprep.mubr.f32.mxu0 0.0
      %1016 = vmatmul.mubr.f32.gmra.mrb[0].mxu0 %v802
      %v1017 = vpop.f32.mrb[0].mxu0
      %v1018 = vadd.f32 0.0, %v1017
      %v1019 = vpop.f32.mrb[0].mxu0
      %1020 = vmatprep.mubr.f32.mxu0 0.0
      %1021 = vmatmul.mubr.f32.gmra.mrb[0].mxu0 %v805
      %v1022 = vpop.f32.mrb[0].mxu0
      %v1023 = vadd.f32 0.0, %v1022
      %v1024 = vpop.f32.mrb[0].mxu0
      %1025 = vmatprep.mubr.f32.mxu0 0.0
      %1026 = vmatmul.mubr.f32.gmra.mrb[0].mxu0 %v808
      %v1027 = vpop.f32.mrb[0].mxu0
      %v1028 = vadd.f32 0.0, %v1027
      %v1029 = vpop.f32.mrb[0].mxu0
      %1030 = vmatprep.mubr.f32.mxu0 0.0
      %1031 = vmatmul.mubr.f32.gmra.mrb[0].mxu0 %v811
      %v1032 = vpop.f32.mrb[0].mxu0
      %v1033 = vadd.f32 0.0, %v1032
      %v1034 = vpop.f32.mrb[0].mxu0
      %1035 = vmatprep.mubr.f32.mxu0 0.0
      %1036 = vmatmul.mubr.f32.gmra.mrb[0].mxu0 %v814
      %v1037 = vpop.f32.mrb[0].mxu0
      %v1038 = vadd.f32 0.0, %v1037
      %v1039 = vpop.f32.mrb[0].mxu0
      %1040 = vmatprep.mubr.f32.mxu0 0.0
      %1041 = vmatmul.mubr.f32.gmra.mrb[0].mxu0 %v817
      %v1042 = vpop.f32.mrb[0].mxu0
      %v1043 = vadd.f32 0.0, %v1042
      %v1044 = vpop.f32.mrb[0].mxu0
      %1045 = vmatprep.mubr.f32.mxu0 0.0
      %1046 = vmatmul.mubr.f32.gmra.mrb[0].mxu0 %v820
      %v1047 = vpop.f32.mrb[0].mxu0
      %v1048 = vadd.f32 0.0, %v1047
      %v1049 = vpop.f32.mrb[0].mxu0
      %1050 = vdwg.mxu0
      %v1051 = vld [vmem:[%s5] sm:$0xff]
      %1053 = vset.pattern.permute.xlu0 0
      %1054 = vperm.xlu0 %1053, %v1051
      %v1055 = vpop.permute.xlu0 %1054
      %1057 = vrot.lane.b32.xlu0 %v889, 19
      %v1058 = vpop.permute.xlu0 %1057
      %1059 = vrot.lane.b32.xlu0 %v891, 19
      %v1060 = vpop.permute.xlu0 %1059
      %1061 = vrot.lane.b32.xlu0 %v1008, 19
      %v1062 = vpop.permute.xlu0 %1061
      %v1063 = vsel %vm650, %v1060, %v1062
      %v1064 = vsel %vm650, %v1058, %v1060
      %v1065 = vsel %vm650, %v1062, %v1058
      %v1066 = vadd.f32 %v1055, %v1065
      %v1067 = vadd.f32 %v1055, %v1064
      %v1068 = vadd.f32 %v1055, %v1063
      %1069 = vrot.lane.b32.xlu0 %v895, 18
      %v1070 = vpop.permute.xlu0 %1069
      %1071 = vrot.lane.b32.xlu0 %v897, 18
      %v1072 = vpop.permute.xlu0 %1071
      %1073 = vrot.lane.b32.xlu0 %v1013, 18
      %v1074 = vpop.permute.xlu0 %1073
      %v1075 = vsel %vm663, %v1072, %v1074
      %v1076 = vsel %vm663, %v1070, %v1072
      %v1077 = vsel %vm663, %v1074, %v1070
      %v1078 = vadd.f32 %v1066, %v1077
      %v1079 = vadd.f32 %v1067, %v1076
      %v1080 = vadd.f32 %v1068, %v1075
      %1081 = vrot.lane.b32.xlu0 %v901, 17
      %v1082 = vpop.permute.xlu0 %1081
      %1083 = vrot.lane.b32.xlu0 %v903, 17
      %v1084 = vpop.permute.xlu0 %1083
      %1085 = vrot.lane.b32.xlu0 %v1018, 17
      %v1086 = vpop.permute.xlu0 %1085
      %v1087 = vsel %vm676, %v1084, %v1086
      %v1088 = vsel %vm676, %v1082, %v1084
      %v1089 = vsel %vm676, %v1086, %v1082
      %v1090 = vadd.f32 %v1078, %v1089
      %v1091 = vadd.f32 %v1079, %v1088
      %v1092 = vadd.f32 %v1080, %v1087
      %1093 = vrot.lane.b32.xlu0 %v907, 1
      %v1094 = vpop.permute.xlu0 %1093
      %1095 = vrot.lane.b32.xlu0 %v909, 1
      %v1096 = vpop.permute.xlu0 %1095
      %1097 = vrot.lane.b32.xlu0 %v1023, 1
      %v1098 = vpop.permute.xlu0 %1097
      %v1099 = vsel %vm689, %v1096, %v1098
      %v1100 = vsel %vm689, %v1094, %v1096
      %v1101 = vsel %vm689, %v1098, %v1094
      %v1102 = vadd.f32 %v1090, %v1101
      %v1103 = vadd.f32 %v1091, %v1100
      %v1104 = vadd.f32 %v1092, %v1099
      %v1105 = vadd.f32 %v1102, %v913
      %v1106 = vadd.f32 %v1103, %v915
      %v1107 = vadd.f32 %v1104, %v1028
      %1108 = vrot.lane.b32.xlu0 %v919, 127
      %v1109 = vpop.permute.xlu0 %1108
      %1110 = vrot.lane.b32.xlu0 %v921, 127
      %v1111 = vpop.permute.xlu0 %1110
      %1112 = vrot.lane.b32.xlu0 %v1033, 127
      %v1113 = vpop.permute.xlu0 %1112
      %v1114 = vsel %vm705, %v1111, %v1113
      %v1115 = vsel %vm705, %v1109, %v1111
      %v1116 = vsel %vm705, %v1113, %v1109
      %v1117 = vadd.f32 %v1105, %v1115
      %v1118 = vadd.f32 %v1106, %v1114
      %v1119 = vadd.f32 %v1107, %v1116
      %1120 = vrot.lane.b32.xlu0 %v925, 111
      %v1121 = vpop.permute.xlu0 %1120
      %1122 = vrot.lane.b32.xlu0 %v927, 111
      %v1123 = vpop.permute.xlu0 %1122
      %1124 = vrot.lane.b32.xlu0 %v1038, 111
      %v1125 = vpop.permute.xlu0 %1124
      %v1126 = vsel %vm718, %v1123, %v1125
      %v1127 = vsel %vm718, %v1121, %v1123
      %v1128 = vsel %vm718, %v1125, %v1121
      %v1129 = vadd.f32 %v1117, %v1127
      %v1130 = vadd.f32 %v1118, %v1126
      %v1131 = vadd.f32 %v1119, %v1128
      %1132 = vrot.lane.b32.xlu0 %v931, 110
      %v1133 = vpop.permute.xlu0 %1132
      %1134 = vrot.lane.b32.xlu0 %v933, 110
      %v1135 = vpop.permute.xlu0 %1134
      %1136 = vrot.lane.b32.xlu0 %v1043, 110
      %v1137 = vpop.permute.xlu0 %1136
      %v1138 = vsel %vm731, %v1135, %v1137
      %v1139 = vsel %vm731, %v1133, %v1135
      %v1140 = vsel %vm731, %v1137, %v1133
      %v1141 = vadd.f32 %v1129, %v1139
      %v1142 = vadd.f32 %v1130, %v1138
      %v1143 = vadd.f32 %v1131, %v1140
      %1144 = vrot.lane.b32.xlu0 %v937, 109
      %v1145 = vpop.permute.xlu0 %1144
      %1146 = vrot.lane.b32.xlu0 %v939, 109
      %v1147 = vpop.permute.xlu0 %1146
      %1148 = vrot.lane.b32.xlu0 %v1048, 109
      %v1149 = vpop.permute.xlu0 %1148
      %v1150 = vsel %vm744, %v1147, %v1149
      %v1151 = vsel %vm744, %v1145, %v1147
      %v1152 = vsel %vm744, %v1149, %v1145
      %v1153 = vadd.f32 %v1141, %v1151
      %v1154 = vadd.f32 %v1142, %v1150
      %v1155 = vadd.f32 %v1143, %v1152
      %v1156 = vmul.f32 %v1153, 0.1
      %v1157 = vmul.f32 %v1154, 0.1
      %v1158 = vmul.f32 %v1155, 0.1
      %v1159 = vmax.f32 %v1153, %v1156
      %v1160 = vmax.f32 %v1154, %v1157
      %v1161 = vmax.f32 %v1155, %v1158
      %v1162 = vmul.f32 %v1159, %v761
      %v1163 = vmul.f32 %v1160, %v765
      %v1164 = vmul.f32 %v1161, %v769
      %1165 = vst [vmem:[#allocation2 + $0x30] sm:$0xff] %v1162
      %1166 = vst [vmem:[#allocation2 + $0x38] sm:$0xff] %v1163
      %1167 = vst [vmem:[#allocation2 + $0x40] sm:$0xff] %v1164
      %v1168 = vld [vmem:[#allocation2] sm:$0xff]
      %v1169 = vld [vmem:[#allocation2 + $0x8] sm:$0xff]
      %v1170 = vld [vmem:[#allocation2 + $0x10] sm:$0xff]
      %v1171 = vld [vmem:[#allocation2 + $0x18] sm:$0xff]
      %v1172 = vld [vmem:[#allocation2 + $0x20] sm:$0xff]
      %v1173 = vld [vmem:[#allocation2 + $0x28] sm:$0xff]
      %v1174 = vld [vmem:[#allocation2 + $0x30] sm:$0xff]
      %v1175 = vld [vmem:[#allocation2 + $0x38] sm:$0xff]
      %v1176 = vld [vmem:[#allocation2 + $0x40] sm:$0xff]
      %v1177 = vld [vmem:[%s6] sm:$0xff]
      %v1178 = vld [vmem:[%s6 + $0x8] sm:$0xff]
      %v1179 = vld [vmem:[%s6 + $0x10] sm:$0xff]
      %v1180 = vld [vmem:[%s6 + $0x18] sm:$0xff]
      %v1181 = vld [vmem:[%s6 + $0x20] sm:$0xff]
      %v1182 = vld [vmem:[%s6 + $0x28] sm:$0xff]
      %v1183 = vld [vmem:[%s6 + $0x30] sm:$0xff]
      %v1184 = vld [vmem:[%s6 + $0x38] sm:$0xff]
      %v1185 = vld [vmem:[%s6 + $0x40] sm:$0xff]
      %vm1186 = vcmask 195584
      %v1188 = vsel %vm1186, %v1177, 0
      %v1191 = vsel %vm1186, %v1178, 0
      %v1194 = vsel %vm1186, %v1179, 0
      %v1197 = vsel %vm1186, %v1180, 0
      %v1200 = vsel %vm1186, %v1181, 0
      %v1203 = vsel %vm1186, %v1182, 0
      %v1206 = vsel %vm1186, %v1183, 0
      %v1209 = vsel %vm1186, %v1184, 0
      %v1212 = vsel %vm1186, %v1185, 0
      %1214 = vmatprep.subr.mxu0 %v1169
      %1215 = vmatpush1.msra.mxu0 %v1168
      %1216 = vmatprep.subr.mxu0 %v1172
      %1217 = vmatpush1.msra.mxu0 %v1171
      %1218 = vmatprep.subr.mxu0 %v1175
      %1219 = vmatpush1.msra.mxu0 %v1174
      %1220 = vmatprep.subr.mxu0 0.0
      %1221 = vmatpush1.msra.mxu0 0.0
      %1222 = vmatprep.subr.mxu0 0.0
      %1223 = vmatpush1.msra.mxu0 0.0
      %1224 = vmatprep.subr.mxu0 0.0
      %1225 = vmatpush1.msra.mxu0 0.0
      %1226 = vmatprep.subr.mxu0 0.0
      %1227 = vmatpush1.msra.mxu0 0.0
      %1228 = vmatprep.subr.mxu0 0.0
      %1229 = vmatpush1.msra.mxu0 0.0
      %1230 = vmatprep.subr.mxu0 0.0
      %1231 = vmatpush1.msra.mxu0 0.0
      %1232 = vmatprep.subr.mxu0 0.0
      %1233 = vmatpush1.msra.mxu0 0.0
      %1234 = vmatprep.subr.mxu0 0.0
      %1235 = vmatpush1.msra.mxu0 0.0
      %1236 = vmatprep.subr.mxu0 0.0
      %1237 = vmatpush1.msra.mxu0 0.0
      %1238 = vmatprep.subr.mxu0 0.0
      %1239 = vmatpush1.msra.mxu0 0.0
      %1240 = vmatprep.subr.mxu0 0.0
      %1241 = vmatpush1.msra.mxu0 0.0
      %1242 = vmatprep.subr.mxu0 0.0
      %1243 = vmatpush1.msra.mxu0 0.0
      %1244 = vmatprep.subr.mxu0 0.0
      %1245 = vmatpush1.msra.mxu0 0.0
      %1246 = vmatprep.subr.mxu0 0.0
      %1247 = vmatpush1.msra.mxu0 0.0
      %1248 = vmatprep.subr.mxu0 0.0
      %1249 = vmatpush1.msra.mxu0 0.0
      %1250 = vmatprep.subr.mxu0 0.0
      %1251 = vmatpush1.msra.mxu0 0.0
      %1252 = vmatprep.subr.mxu0 0.0
      %1253 = vmatpush1.msra.mxu0 0.0
      %1254 = vmatprep.subr.mxu0 0.0
      %1255 = vmatpush1.msra.mxu0 0.0
      %1256 = vmatprep.subr.mxu0 0.0
      %1257 = vmatpush1.msra.mxu0 0.0
      %1258 = vmatprep.subr.mxu0 0.0
      %1259 = vmatpush1.msra.mxu0 0.0
      %1260 = vmatprep.subr.mxu0 0.0
      %1261 = vmatpush1.msra.mxu0 0.0
      %1262 = vmatprep.subr.mxu0 0.0
      %1263 = vmatpush1.msra.mxu0 0.0
      %1264 = vmatprep.subr.mxu0 0.0
      %1265 = vmatpush1.msra.mxu0 0.0
      %1266 = vmatprep.subr.mxu0 0.0
      %1267 = vmatpush1.msra.mxu0 0.0
      %1268 = vmatprep.subr.mxu0 0.0
      %1269 = vmatpush1.msra.mxu0 0.0
      %1270 = vmatprep.subr.mxu0 0.0
      %1271 = vmatpush1.msra.mxu0 0.0
      %1272 = vmatprep.subr.mxu0 0.0
      %1273 = vmatpush1.msra.mxu0 0.0
      %1274 = vmatprep.subr.mxu0 0.0
      %1275 = vmatpush1.msra.mxu0 0.0
      %1276 = vmatprep.subr.mxu0 0.0
      %1277 = vmatpush1.msra.mxu0 0.0
      %1278 = vmatprep.mubr.f32.mxu0 0.0
      %1279 = vmatmul.mubr.f32.gmra.mrb[0].mxu0 %v1188
      %v1280 = vpop.f32.mrb[0].mxu0
      %v1281 = vadd.f32 0.0, %v1280
      %v1282 = vpop.f32.mrb[0].mxu0
      %v1283 = vadd.f32 0.0, %v1282
      %1284 = vmatprep.mubr.f32.mxu0 0.0
      %1285 = vmatmul.mubr.f32.gmra.mrb[0].mxu0 %v1191
      %v1286 = vpop.f32.mrb[0].mxu0
      %v1287 = vadd.f32 0.0, %v1286
      %v1288 = vpop.f32.mrb[0].mxu0
      %v1289 = vadd.f32 0.0, %v1288
      %1290 = vmatprep.mubr.f32.mxu0 0.0
      %1291 = vmatmul.mubr.f32.gmra.mrb[0].mxu0 %v1194
      %v1292 = vpop.f32.mrb[0].mxu0
      %v1293 = vadd.f32 0.0, %v1292
      %v1294 = vpop.f32.mrb[0].mxu0
      %v1295 = vadd.f32 0.0, %v1294
      %1296 = vmatprep.mubr.f32.mxu0 0.0
      %1297 = vmatmul.mubr.f32.gmra.mrb[0].mxu0 %v1197
      %v1298 = vpop.f32.mrb[0].mxu0
      %v1299 = vadd.f32 0.0, %v1298
      %v1300 = vpop.f32.mrb[0].mxu0
      %v1301 = vadd.f32 0.0, %v1300
      %1302 = vmatprep.mubr.f32.mxu0 0.0
      %1303 = vmatmul.mubr.f32.gmra.mrb[0].mxu0 %v1200
      %v1304 = vpop.f32.mrb[0].mxu0
      %v1305 = vadd.f32 0.0, %v1304
      %v1306 = vpop.f32.mrb[0].mxu0
      %v1307 = vadd.f32 0.0, %v1306
      %1308 = vmatprep.mubr.f32.mxu0 0.0
      %1309 = vmatmul.mubr.f32.gmra.mrb[0].mxu0 %v1203
      %v1310 = vpop.f32.mrb[0].mxu0
      %v1311 = vadd.f32 0.0, %v1310
      %v1312 = vpop.f32.mrb[0].mxu0
      %v1313 = vadd.f32 0.0, %v1312
      %1314 = vmatprep.mubr.f32.mxu0 0.0
      %1315 = vmatmul.mubr.f32.gmra.mrb[0].mxu0 %v1206
      %v1316 = vpop.f32.mrb[0].mxu0
      %v1317 = vadd.f32 0.0, %v1316
      %v1318 = vpop.f32.mrb[0].mxu0
      %v1319 = vadd.f32 0.0, %v1318
      %1320 = vmatprep.mubr.f32.mxu0 0.0
      %1321 = vmatmul.mubr.f32.gmra.mrb[0].mxu0 %v1209
      %v1322 = vpop.f32.mrb[0].mxu0
      %v1323 = vadd.f32 0.0, %v1322
      %v1324 = vpop.f32.mrb[0].mxu0
      %v1325 = vadd.f32 0.0, %v1324
      %1326 = vmatprep.mubr.f32.mxu0 0.0
      %1327 = vmatmul.mubr.f32.gmra.mrb[0].mxu0 %v1212
      %v1328 = vpop.f32.mrb[0].mxu0
      %v1329 = vadd.f32 0.0, %v1328
      %v1330 = vpop.f32.mrb[0].mxu0
      %v1331 = vadd.f32 0.0, %v1330
      %1332 = vdwg.mxu0
      %1333 = vmatprep.subr.mxu0 0.0
      %1334 = vmatpush1.msra.mxu0 %v1170
      %1335 = vmatprep.subr.mxu0 0.0
      %1336 = vmatpush1.msra.mxu0 %v1173
      %1337 = vmatprep.subr.mxu0 0.0
      %1338 = vmatpush1.msra.mxu0 %v1176
      %1339 = vmatprep.subr.mxu0 0.0
      %1340 = vmatpush1.msra.mxu0 0.0
      %1341 = vmatprep.subr.mxu0 0.0
      %1342 = vmatpush1.msra.mxu0 0.0
      %1343 = vmatprep.subr.mxu0 0.0
      %1344 = vmatpush1.msra.mxu0 0.0
      %1345 = vmatprep.subr.mxu0 0.0
      %1346 = vmatpush1.msra.mxu0 0.0
      %1347 = vmatprep.subr.mxu0 0.0
      %1348 = vmatpush1.msra.mxu0 0.0
      %1349 = vmatprep.subr.mxu0 0.0
      %1350 = vmatpush1.msra.mxu0 0.0
      %1351 = vmatprep.subr.mxu0 0.0
      %1352 = vmatpush1.msra.mxu0 0.0
      %1353 = vmatprep.subr.mxu0 0.0
      %1354 = vmatpush1.msra.mxu0 0.0
      %1355 = vmatprep.subr.mxu0 0.0
      %1356 = vmatpush1.msra.mxu0 0.0
      %1357 = vmatprep.subr.mxu0 0.0
      %1358 = vmatpush1.msra.mxu0 0.0
      %1359 = vmatprep.subr.mxu0 0.0
      %1360 = vmatpush1.msra.mxu0 0.0
      %1361 = vmatprep.subr.mxu0 0.0
      %1362 = vmatpush1.msra.mxu0 0.0
      %1363 = vmatprep.subr.mxu0 0.0
      %1364 = vmatpush1.msra.mxu0 0.0
      %1365 = vmatprep.subr.mxu0 0.0
      %1366 = vmatpush1.msra.mxu0 0.0
      %1367 = vmatprep.subr.mxu0 0.0
      %1368 = vmatpush1.msra.mxu0 0.0
      %1369 = vmatprep.subr.mxu0 0.0
      %1370 = vmatpush1.msra.mxu0 0.0
      %1371 = vmatprep.subr.mxu0 0.0
      %1372 = vmatpush1.msra.mxu0 0.0
      %1373 = vmatprep.subr.mxu0 0.0
      %1374 = vmatpush1.msra.mxu0 0.0
      %1375 = vmatprep.subr.mxu0 0.0
      %1376 = vmatpush1.msra.mxu0 0.0
      %1377 = vmatprep.subr.mxu0 0.0
      %1378 = vmatpush1.msra.mxu0 0.0
      %1379 = vmatprep.subr.mxu0 0.0
      %1380 = vmatpush1.msra.mxu0 0.0
      %1381 = vmatprep.subr.mxu0 0.0
      %1382 = vmatpush1.msra.mxu0 0.0
      %1383 = vmatprep.subr.mxu0 0.0
      %1384 = vmatpush1.msra.mxu0 0.0
      %1385 = vmatprep.subr.mxu0 0.0
      %1386 = vmatpush1.msra.mxu0 0.0
      %1387 = vmatprep.subr.mxu0 0.0
      %1388 = vmatpush1.msra.mxu0 0.0
      %1389 = vmatprep.subr.mxu0 0.0
      %1390 = vmatpush1.msra.mxu0 0.0
      %1391 = vmatprep.subr.mxu0 0.0
      %1392 = vmatpush1.msra.mxu0 0.0
      %1393 = vmatprep.subr.mxu0 0.0
      %1394 = vmatpush1.msra.mxu0 0.0
      %1395 = vmatprep.subr.mxu0 0.0
      %1396 = vmatpush1.msra.mxu0 0.0
      %1397 = vmatprep.mubr.f32.mxu0 0.0
      %1398 = vmatmul.mubr.f32.gmra.mrb[0].mxu0 %v1188
      %v1399 = vpop.f32.mrb[0].mxu0
      %v1400 = vadd.f32 0.0, %v1399
      %v1401 = vpop.f32.mrb[0].mxu0
      %1402 = vmatprep.mubr.f32.mxu0 0.0
      %1403 = vmatmul.mubr.f32.gmra.mrb[0].mxu0 %v1191
      %v1404 = vpop.f32.mrb[0].mxu0
      %v1405 = vadd.f32 0.0, %v1404
      %v1406 = vpop.f32.mrb[0].mxu0
      %1407 = vmatprep.mubr.f32.mxu0 0.0
      %1408 = vmatmul.mubr.f32.gmra.mrb[0].mxu0 %v1194
      %v1409 = vpop.f32.mrb[0].mxu0
      %v1410 = vadd.f32 0.0, %v1409
      %v1411 = vpop.f32.mrb[0].mxu0
      %1412 = vmatprep.mubr.f32.mxu0 0.0
      %1413 = vmatmul.mubr.f32.gmra.mrb[0].mxu0 %v1197
      %v1414 = vpop.f32.mrb[0].mxu0
      %v1415 = vadd.f32 0.0, %v1414
      %v1416 = vpop.f32.mrb[0].mxu0
      %1417 = vmatprep.mubr.f32.mxu0 0.0
      %1418 = vmatmul.mubr.f32.gmra.mrb[0].mxu0 %v1200
      %v1419 = vpop.f32.mrb[0].mxu0
      %v1420 = vadd.f32 0.0, %v1419
      %v1421 = vpop.f32.mrb[0].mxu0
      %1422 = vmatprep.mubr.f32.mxu0 0.0
      %1423 = vmatmul.mubr.f32.gmra.mrb[0].mxu0 %v1203
      %v1424 = vpop.f32.mrb[0].mxu0
      %v1425 = vadd.f32 0.0, %v1424
      %v1426 = vpop.f32.mrb[0].mxu0
      %1427 = vmatprep.mubr.f32.mxu0 0.0
      %1428 = vmatmul.mubr.f32.gmra.mrb[0].mxu0 %v1206
      %v1429 = vpop.f32.mrb[0].mxu0
      %v1430 = vadd.f32 0.0, %v1429
      %v1431 = vpop.f32.mrb[0].mxu0
      %1432 = vmatprep.mubr.f32.mxu0 0.0
      %1433 = vmatmul.mubr.f32.gmra.mrb[0].mxu0 %v1209
      %v1434 = vpop.f32.mrb[0].mxu0
      %v1435 = vadd.f32 0.0, %v1434
      %v1436 = vpop.f32.mrb[0].mxu0
      %1437 = vmatprep.mubr.f32.mxu0 0.0
      %1438 = vmatmul.mubr.f32.gmra.mrb[0].mxu0 %v1212
      %v1439 = vpop.f32.mrb[0].mxu0
      %v1440 = vadd.f32 0.0, %v1439
      %v1441 = vpop.f32.mrb[0].mxu0
      %1442 = vdwg.mxu0
      %v1443 = vld [vmem:[%s7] sm:$0xff]
      %1445 = vset.pattern.permute.xlu0 0
      %1446 = vperm.xlu0 %1445, %v1443
      %v1447 = vpop.permute.xlu0 %1446
      %1449 = vrot.lane.b32.xlu0 %v1281, 19
      %v1450 = vpop.permute.xlu0 %1449
      %1451 = vrot.lane.b32.xlu0 %v1283, 19
      %v1452 = vpop.permute.xlu0 %1451
      %1453 = vrot.lane.b32.xlu0 %v1400, 19
      %v1454 = vpop.permute.xlu0 %1453
      %v1455 = vsel %vm650, %v1452, %v1454
      %v1456 = vsel %vm650, %v1450, %v1452
      %v1457 = vsel %vm650, %v1454, %v1450
      %v1458 = vadd.f32 %v1447, %v1457
      %v1459 = vadd.f32 %v1447, %v1456
      %v1460 = vadd.f32 %v1447, %v1455
      %1461 = vrot.lane.b32.xlu0 %v1287, 18
      %v1462 = vpop.permute.xlu0 %1461
      %1463 = vrot.lane.b32.xlu0 %v1289, 18
      %v1464 = vpop.permute.xlu0 %1463
      %1465 = vrot.lane.b32.xlu0 %v1405, 18
      %v1466 = vpop.permute.xlu0 %1465
      %v1467 = vsel %vm663, %v1464, %v1466
      %v1468 = vsel %vm663, %v1462, %v1464
      %v1469 = vsel %vm663, %v1466, %v1462
      %v1470 = vadd.f32 %v1458, %v1469
      %v1471 = vadd.f32 %v1459, %v1468
      %v1472 = vadd.f32 %v1460, %v1467
      %1473 = vrot.lane.b32.xlu0 %v1293, 17
      %v1474 = vpop.permute.xlu0 %1473
      %1475 = vrot.lane.b32.xlu0 %v1295, 17
      %v1476 = vpop.permute.xlu0 %1475
      %1477 = vrot.lane.b32.xlu0 %v1410, 17
      %v1478 = vpop.permute.xlu0 %1477
      %v1479 = vsel %vm676, %v1476, %v1478
      %v1480 = vsel %vm676, %v1474, %v1476
      %v1481 = vsel %vm676, %v1478, %v1474
      %v1482 = vadd.f32 %v1470, %v1481
      %v1483 = vadd.f32 %v1471, %v1480
      %v1484 = vadd.f32 %v1472, %v1479
      %1485 = vrot.lane.b32.xlu0 %v1299, 1
      %v1486 = vpop.permute.xlu0 %1485
      %1487 = vrot.lane.b32.xlu0 %v1301, 1
      %v1488 = vpop.permute.xlu0 %1487
      %1489 = vrot.lane.b32.xlu0 %v1415, 1
      %v1490 = vpop.permute.xlu0 %1489
      %v1491 = vsel %vm689, %v1488, %v1490
      %v1492 = vsel %vm689, %v1486, %v1488
      %v1493 = vsel %vm689, %v1490, %v1486
      %v1494 = vadd.f32 %v1482, %v1493
      %v1495 = vadd.f32 %v1483, %v1492
      %v1496 = vadd.f32 %v1484, %v1491
      %v1497 = vadd.f32 %v1494, %v1305
      %v1498 = vadd.f32 %v1495, %v1307
      %v1499 = vadd.f32 %v1496, %v1420
      %1500 = vrot.lane.b32.xlu0 %v1311, 127
      %v1501 = vpop.permute.xlu0 %1500
      %1502 = vrot.lane.b32.xlu0 %v1313, 127
      %v1503 = vpop.permute.xlu0 %1502
      %1504 = vrot.lane.b32.xlu0 %v1425, 127
      %v1505 = vpop.permute.xlu0 %1504
      %v1506 = vsel %vm705, %v1503, %v1505
      %v1507 = vsel %vm705, %v1501, %v1503
      %v1508 = vsel %vm705, %v1505, %v1501
      %v1509 = vadd.f32 %v1497, %v1507
      %v1510 = vadd.f32 %v1498, %v1506
      %v1511 = vadd.f32 %v1499, %v1508
      %1512 = vrot.lane.b32.xlu0 %v1317, 111
      %v1513 = vpop.permute.xlu0 %1512
      %1514 = vrot.lane.b32.xlu0 %v1319, 111
      %v1515 = vpop.permute.xlu0 %1514
      %1516 = vrot.lane.b32.xlu0 %v1430, 111
      %v1517 = vpop.permute.xlu0 %1516
      %v1518 = vsel %vm718, %v1515, %v1517
      %v1519 = vsel %vm718, %v1513, %v1515
      %v1520 = vsel %vm718, %v1517, %v1513
      %v1521 = vadd.f32 %v1509, %v1519
      %v1522 = vadd.f32 %v1510, %v1518
      %v1523 = vadd.f32 %v1511, %v1520
      %1524 = vrot.lane.b32.xlu0 %v1323, 110
      %v1525 = vpop.permute.xlu0 %1524
      %1526 = vrot.lane.b32.xlu0 %v1325, 110
      %v1527 = vpop.permute.xlu0 %1526
      %1528 = vrot.lane.b32.xlu0 %v1435, 110
      %v1529 = vpop.permute.xlu0 %1528
      %v1530 = vsel %vm731, %v1527, %v1529
      %v1531 = vsel %vm731, %v1525, %v1527
      %v1532 = vsel %vm731, %v1529, %v1525
      %v1533 = vadd.f32 %v1521, %v1531
      %v1534 = vadd.f32 %v1522, %v1530
      %v1535 = vadd.f32 %v1523, %v1532
      %1536 = vrot.lane.b32.xlu0 %v1329, 109
      %v1537 = vpop.permute.xlu0 %1536
      %1538 = vrot.lane.b32.xlu0 %v1331, 109
      %v1539 = vpop.permute.xlu0 %1538
      %1540 = vrot.lane.b32.xlu0 %v1440, 109
      %v1541 = vpop.permute.xlu0 %1540
      %v1542 = vsel %vm744, %v1539, %v1541
      %v1543 = vsel %vm744, %v1537, %v1539
      %v1544 = vsel %vm744, %v1541, %v1537
      %v1545 = vadd.f32 %v1533, %v1543
      %v1546 = vadd.f32 %v1534, %v1542
      %v1547 = vadd.f32 %v1535, %v1544
      %v1548 = vmul.f32 %v1545, 0.1
      %v1549 = vmul.f32 %v1546, 0.1
      %v1550 = vmul.f32 %v1547, 0.1
      %v1551 = vmax.f32 %v1545, %v1548
      %v1552 = vmax.f32 %v1546, %v1549
      %v1553 = vmax.f32 %v1547, %v1550
      %v1554 = vmul.f32 %v1551, %v761
      %v1555 = vmul.f32 %v1552, %v765
      %v1556 = vmul.f32 %v1553, %v769
      %1557 = vst [vmem:[#allocation2 + $0x48] sm:$0xff] %v1554
      %1558 = vst [vmem:[#allocation2 + $0x50] sm:$0xff] %v1555
      %1559 = vst [vmem:[#allocation2 + $0x58] sm:$0xff] %v1556
      %v1560 = vld [vmem:[#allocation2] sm:$0xff]
      %v1561 = vld [vmem:[#allocation2 + $0x8] sm:$0xff]
      %v1562 = vld [vmem:[#allocation2 + $0x10] sm:$0xff]
      %v1563 = vld [vmem:[#allocation2 + $0x18] sm:$0xff]
      %v1564 = vld [vmem:[#allocation2 + $0x20] sm:$0xff]
      %v1565 = vld [vmem:[#allocation2 + $0x28] sm:$0xff]
      %v1566 = vld [vmem:[#allocation2 + $0x30] sm:$0xff]
      %v1567 = vld [vmem:[#allocation2 + $0x38] sm:$0xff]
      %v1568 = vld [vmem:[#allocation2 + $0x40] sm:$0xff]
      %v1569 = vld [vmem:[#allocation2 + $0x48] sm:$0xff]
      %v1570 = vld [vmem:[#allocation2 + $0x50] sm:$0xff]
      %v1571 = vld [vmem:[#allocation2 + $0x58] sm:$0xff]
      %v1572 = vld [vmem:[%s8] sm:$0xff]
      %v1573 = vld [vmem:[%s9] sm:$0xff]
      %1575 = vset.pattern.permute.xlu0 0
      %1576 = vperm.xlu0 %1575, %v1573
      %v1577 = vpop.permute.xlu0 %1576
      %vm1579 = vcmask 261120
      %v1581 = vsel %vm1579, %v1572, 0
      %1583 = vmatprep.subr.mxu0 %v1561
      %1584 = vmatpush1.msra.mxu0 %v1560
      %1585 = vmatprep.subr.mxu0 %v1564
      %1586 = vmatpush1.msra.mxu0 %v1563
      %1587 = vmatprep.subr.mxu0 %v1567
      %1588 = vmatpush1.msra.mxu0 %v1566
      %1589 = vmatprep.subr.mxu0 %v1570
      %1590 = vmatpush1.msra.mxu0 %v1569
      %1591 = vmatprep.subr.mxu0 0.0
      %1592 = vmatpush1.msra.mxu0 0.0
      %1593 = vmatprep.subr.mxu0 0.0
      %1594 = vmatpush1.msra.mxu0 0.0
      %1595 = vmatprep.subr.mxu0 0.0
      %1596 = vmatpush1.msra.mxu0 0.0
      %1597 = vmatprep.subr.mxu0 0.0
      %1598 = vmatpush1.msra.mxu0 0.0
      %1599 = vmatprep.subr.mxu0 0.0
      %1600 = vmatpush1.msra.mxu0 0.0
      %1601 = vmatprep.subr.mxu0 0.0
      %1602 = vmatpush1.msra.mxu0 0.0
      %1603 = vmatprep.subr.mxu0 0.0
      %1604 = vmatpush1.msra.mxu0 0.0
      %1605 = vmatprep.subr.mxu0 0.0
      %1606 = vmatpush1.msra.mxu0 0.0
      %1607 = vmatprep.subr.mxu0 0.0
      %1608 = vmatpush1.msra.mxu0 0.0
      %1609 = vmatprep.subr.mxu0 0.0
      %1610 = vmatpush1.msra.mxu0 0.0
      %1611 = vmatprep.subr.mxu0 0.0
      %1612 = vmatpush1.msra.mxu0 0.0
      %1613 = vmatprep.subr.mxu0 0.0
      %1614 = vmatpush1.msra.mxu0 0.0
      %1615 = vmatprep.subr.mxu0 0.0
      %1616 = vmatpush1.msra.mxu0 0.0
      %1617 = vmatprep.subr.mxu0 0.0
      %1618 = vmatpush1.msra.mxu0 0.0
      %1619 = vmatprep.subr.mxu0 0.0
      %1620 = vmatpush1.msra.mxu0 0.0
      %1621 = vmatprep.subr.mxu0 0.0
      %1622 = vmatpush1.msra.mxu0 0.0
      %1623 = vmatprep.subr.mxu0 0.0
      %1624 = vmatpush1.msra.mxu0 0.0
      %1625 = vmatprep.subr.mxu0 0.0
      %1626 = vmatpush1.msra.mxu0 0.0
      %1627 = vmatprep.subr.mxu0 0.0
      %1628 = vmatpush1.msra.mxu0 0.0
      %1629 = vmatprep.subr.mxu0 0.0
      %1630 = vmatpush1.msra.mxu0 0.0
      %1631 = vmatprep.subr.mxu0 0.0
      %1632 = vmatpush1.msra.mxu0 0.0
      %1633 = vmatprep.subr.mxu0 0.0
      %1634 = vmatpush1.msra.mxu0 0.0
      %1635 = vmatprep.subr.mxu0 0.0
      %1636 = vmatpush1.msra.mxu0 0.0
      %1637 = vmatprep.subr.mxu0 0.0
      %1638 = vmatpush1.msra.mxu0 0.0
      %1639 = vmatprep.subr.mxu0 0.0
      %1640 = vmatpush1.msra.mxu0 0.0
      %1641 = vmatprep.subr.mxu0 0.0
      %1642 = vmatpush1.msra.mxu0 0.0
      %1643 = vmatprep.subr.mxu0 0.0
      %1644 = vmatpush1.msra.mxu0 0.0
      %1645 = vmatprep.subr.mxu0 0.0
      %1646 = vmatpush1.msra.mxu0 0.0
      %1647 = vmatprep.mubr.f32.mxu0 0.0
      %1648 = vmatmul.mubr.f32.gmra.mrb[0].mxu0 %v1581
      %v1649 = vpop.f32.mrb[0].mxu0
      %v1650 = vadd.f32 %v1577, %v1649
      %v1651 = vpop.f32.mrb[0].mxu0
      %v1652 = vadd.f32 %v1577, %v1651
      %1653 = vdwg.mxu0
      %1654 = vmatprep.subr.mxu0 0.0
      %1655 = vmatpush1.msra.mxu0 %v1562
      %1656 = vmatprep.subr.mxu0 0.0
      %1657 = vmatpush1.msra.mxu0 %v1565
      %1658 = vmatprep.subr.mxu0 0.0
      %1659 = vmatpush1.msra.mxu0 %v1568
      %1660 = vmatprep.subr.mxu0 0.0
      %1661 = vmatpush1.msra.mxu0 %v1571
      %1662 = vmatprep.subr.mxu0 0.0
      %1663 = vmatpush1.msra.mxu0 0.0
      %1664 = vmatprep.subr.mxu0 0.0
      %1665 = vmatpush1.msra.mxu0 0.0
      %1666 = vmatprep.subr.mxu0 0.0
      %1667 = vmatpush1.msra.mxu0 0.0
      %1668 = vmatprep.subr.mxu0 0.0
      %1669 = vmatpush1.msra.mxu0 0.0
      %1670 = vmatprep.subr.mxu0 0.0
      %1671 = vmatpush1.msra.mxu0 0.0
      %1672 = vmatprep.subr.mxu0 0.0
      %1673 = vmatpush1.msra.mxu0 0.0
      %1674 = vmatprep.subr.mxu0 0.0
      %1675 = vmatpush1.msra.mxu0 0.0
      %1676 = vmatprep.subr.mxu0 0.0
      %1677 = vmatpush1.msra.mxu0 0.0
      %1678 = vmatprep.subr.mxu0 0.0
      %1679 = vmatpush1.msra.mxu0 0.0
      %1680 = vmatprep.subr.mxu0 0.0
      %1681 = vmatpush1.msra.mxu0 0.0
      %1682 = vmatprep.subr.mxu0 0.0
      %1683 = vmatpush1.msra.mxu0 0.0
      %1684 = vmatprep.subr.mxu0 0.0
      %1685 = vmatpush1.msra.mxu0 0.0
      %1686 = vmatprep.subr.mxu0 0.0
      %1687 = vmatpush1.msra.mxu0 0.0
      %1688 = vmatprep.subr.mxu0 0.0
      %1689 = vmatpush1.msra.mxu0 0.0
      %1690 = vmatprep.subr.mxu0 0.0
      %1691 = vmatpush1.msra.mxu0 0.0
      %1692 = vmatprep.subr.mxu0 0.0
      %1693 = vmatpush1.msra.mxu0 0.0
      %1694 = vmatprep.subr.mxu0 0.0
      %1695 = vmatpush1.msra.mxu0 0.0
      %1696 = vmatprep.subr.mxu0 0.0
      %1697 = vmatpush1.msra.mxu0 0.0
      %1698 = vmatprep.subr.mxu0 0.0
      %1699 = vmatpush1.msra.mxu0 0.0
      %1700 = vmatprep.subr.mxu0 0.0
      %1701 = vmatpush1.msra.mxu0 0.0
      %1702 = vmatprep.subr.mxu0 0.0
      %1703 = vmatpush1.msra.mxu0 0.0
      %1704 = vmatprep.subr.mxu0 0.0
      %1705 = vmatpush1.msra.mxu0 0.0
      %1706 = vmatprep.subr.mxu0 0.0
      %1707 = vmatpush1.msra.mxu0 0.0
      %1708 = vmatprep.subr.mxu0 0.0
      %1709 = vmatpush1.msra.mxu0 0.0
      %1710 = vmatprep.subr.mxu0 0.0
      %1711 = vmatpush1.msra.mxu0 0.0
      %1712 = vmatprep.subr.mxu0 0.0
      %1713 = vmatpush1.msra.mxu0 0.0
      %1714 = vmatprep.subr.mxu0 0.0
      %1715 = vmatpush1.msra.mxu0 0.0
      %1716 = vmatprep.subr.mxu0 0.0
      %1717 = vmatpush1.msra.mxu0 0.0
      %1718 = vmatprep.mubr.f32.mxu0 0.0
      %1719 = vmatmul.mubr.f32.gmra.mrb[0].mxu0 %v1581
      %v1720 = vpop.f32.mrb[0].mxu0
      %v1721 = vadd.f32 %v1577, %v1720
      %v1722 = vpop.f32.mrb[0].mxu0
      %1723 = vdwg.mxu0
      %v1724 = vld [vmem:[#allocation2] sm:$0xff]
      %v1725 = vld [vmem:[#allocation2 + $0x8] sm:$0xff]
      %v1726 = vld [vmem:[#allocation2 + $0x10] sm:$0xff]
      %v1727 = vadd.f32 %v1650, %v1724
      %v1728 = vadd.f32 %v1652, %v1725
      %v1729 = vadd.f32 %v1721, %v1726
      %1730 = vst [vmem:[%s359] sm:$0xff] %v1727
      %1731 = vst [vmem:[%s359 + $0x8] sm:$0xff] %v1728
      %1732 = vst [vmem:[%s359 + $0x10] sm:$0xff] %v1729
      %p1733 = scmp.lt.s32.totalorder %s21, 1
      %s1734 = scalar_select %p1733, %s21, 1
      %s1735 = smul.addr %s1734, 3
      %s1736 = smul.addr %s1735, 8
      %s1737 = scalar_lea.vmem %s10, %s1736
      // Predicated region
      $region61: #{rdb_forward.1} parent=59 // pred_check
        %p1738 = pneg %p254
      $region62: #{rdb_forward.1} parent=59 // pred_check_branch
        %1740 = sbr.rel (%p1738) target = $region64
      $region63: #{rdb_forward.1} parent=59 // pred_region
        _
      $region64: #{rdb_forward.1} parent=59 // pred_fallthru
        _
    $region60: #{rdb_forward.1} parent=5 // pred_fallthru
      _
    %p1741 = scmp.le.s32.totalorder 2, %s16
    // Predicated region
    $region65: #{rdb_forward.1} parent=5 // pred_check
      %p1742 = pneg %p1741
    $region66: #{rdb_forward.1} parent=5 // pred_check_branch
      %1744 = sbr.rel (%p1742) target = $region68
    $region67: #{rdb_forward.1} parent=5 // pred_region
      %s1745 = ssub.s32 %s16, 2
      // Predicated region
      $region69: #{rdb_forward.1} parent=67 // pred_check
        %p1746 = pneg %p260
      $region70: #{rdb_forward.1} parent=67 // pred_check_branch
        %1748 = sbr.rel (%p1746) target = $region72
      $region71: #{rdb_forward.1} parent=67 // pred_region
        %p1749 = scmp.lt.s32.totalorder %s22, 1
        %s1750 = scalar_select %p1749, %s22, 1
        %s1751 = smul.addr %s1750, 3
        %s1752 = smul.addr %s1751, 8
        %s1753 = scalar_lea.vmem %s10, %s1752
      $region72: #{rdb_forward.1} parent=67 // pred_fallthru
        _
    $region68: #{rdb_forward.1} parent=5 // pred_fallthru
      _
  $region6: #{rdb_forward.1} parent=0 // loop_footer
    %s20 = sadd.s32 1, %s16
  $region7: #{rdb_forward.1} parent=0 // loop_footer_branch
    %15 = sbr.rel target = $region3
  $region8: #{rdb_forward.1} parent=0 // loop_exit
    _

</llo_original>
